<compile_context>
chip_gen: v5e
topology: v5e:2x2
jax: 0.10.0
libtpu: 0.0.40
codegen_flags: <defaults>
</compile_context>

<pallas_src>
from functools import partial

import jax
import jax.numpy as jnp
from jax.experimental import pallas as pl
from jax.experimental.pallas import tpu as pltpu


# ----------------------------------------------------------------------------
# In-kernel math helpers (channels on sublanes, HW on lanes)
# ----------------------------------------------------------------------------
def _matmul(w, x, use_bf16):
    """w: (C_out, C), x: (C, T) -> (C_out, T) in f32."""
    c = w.shape[1]
    if c <= 32:
        # Tiny contraction: a 128x128(+) systolic array would be <1% utilised
        # and pays full MXU push/drain latency per tile -> unrolled VPU
        # broadcast-FMA loop (stays purely bandwidth-bound).
        acc = w[:, 0:1] * x[0:1, :]
        for k in range(1, c):
            acc = acc + w[:, k:k + 1] * x[k:k + 1, :]
        return acc.astype(jnp.float32)
    if use_bf16:
        w = w.astype(jnp.bfloat16)
        x = x.astype(jnp.bfloat16)
    return jnp.dot(w, x, preferred_element_type=jnp.float32)


def _mlp(x, w1, b1, w2, b2, use_bf16):
    h1 = jnp.maximum(_matmul(w1, x, use_bf16) + b1, 0.0)
    h2 = jnp.maximum(_matmul(w2, h1, use_bf16) + b2, 0.0)
    return h2


# ----------------------------------------------------------------------------
# Pass 1: hidden activation h (optionally stored) + per-(image, chunk) partial
# sum / sum-of-squares of h for the BN batch statistics.  The partials are
# accumulated LANE-WISE (VPU adds only) in VMEM scratch and written once per
# (n, p) on the last HW tile; the single cross-lane reduction runs in the
# wrapper, keeping the XLUs off the critical path.
# ----------------------------------------------------------------------------
def _make_stats_kernel(store_h, use_bf16):
    def kernel(x_ref, w1_ref, b1_ref, w2_ref, b2_ref, *rest):
        if store_h:
            h_ref, sum_ref, sq_ref, acc_s, acc_q = rest
        else:
            sum_ref, sq_ref, acc_s, acc_q = rest
        j = pl.program_id(2)

        @pl.when(j == 0)
        def _():
            acc_s[...] = jnp.zeros_like(acc_s)
            acc_q[...] = jnp.zeros_like(acc_q)

        h = _mlp(x_ref[0], w1_ref[...], b1_ref[...], w2_ref[...], b2_ref[...],
                 use_bf16)
        if store_h:
            h_ref[0] = h.astype(h_ref.dtype)

        hh = h * h
        t = h.shape[-1]
        lw = acc_s.shape[-1]
        for off in range(0, t, lw):          # lane-aligned VPU adds only
            width = min(lw, t - off)
            acc_s[:, 0:width] += h[:, off:off + width]
            acc_q[:, 0:width] += hh[:, off:off + width]

        @pl.when(j == pl.num_programs(2) - 1)
        def _():
            sum_ref[0, 0] = acc_s[...]
            sq_ref[0, 0] = acc_q[...]

    return kernel


# ----------------------------------------------------------------------------
# Pass 2a (store-h path): pure FMA -- read h, apply precombined scale/shift.
# ----------------------------------------------------------------------------
def _fma_kernel(h_ref, scale_ref, shift_ref, o_ref):
    o_ref[0] = h_ref[0].astype(jnp.float32) * scale_ref[...] + shift_ref[...]


# ----------------------------------------------------------------------------
# Pass 2b (recompute path, only when C_out > C_in): redo the two tiny matmuls
# and apply the precombined BN scale/shift (lane-dense stores).
# ----------------------------------------------------------------------------
def _make_bn_recompute_kernel(use_bf16):
    def kernel(x_ref, w1_ref, b1_ref, w2_ref, b2_ref,
               scale_ref, shift_ref, o_ref):
        h = _mlp(x_ref[0], w1_ref[...], b1_ref[...], w2_ref[...], b2_ref[...],
                 use_bf16)
        o_ref[0] = h * scale_ref[...] + shift_ref[...]

    return kernel


# ----------------------------------------------------------------------------
# Tiling helpers
# ----------------------------------------------------------------------------
def _vmem_capacity_bytes():
    try:
        info = pltpu.get_tpu_info()
        cap = getattr(info, "vmem_capacity_bytes", None)
        if cap:
            return int(cap)
    except Exception:
        pass
    return 64 * 1024 * 1024          # conservative (v7x-sized) fallback


def _pick_tile(hw, cap_lanes):
    """Largest multiple-of-128 tile <= cap_lanes dividing hw (lane-dense,
    unmasked vst); falls back to the (always legal) full-extent block."""
    if hw <= 128:
        return hw
    t = (min(hw, cap_lanes) // 128) * 128
    while t >= 128:
        if hw % t == 0:
            return t
        t -= 128
    # TODO(synk): ragged HW with no multiple-of-128 divisor falls back to one
    # full-extent block; a masked cdiv grid would bound VMEM for huge HW.
    return hw


# ----------------------------------------------------------------------------
# Forward wrapper
# ----------------------------------------------------------------------------
@partial(jax.jit, static_argnames=("use_bf16",))
def encoder_forward(x_nchw, w1, b1, w2, b2, gamma, beta, use_bf16=None):
    """x_nchw: (N, C_in, H, W) f32.  Returns (N, C_out, H, W) f32."""
    N, C_in, H, W = x_nchw.shape
    C_out = w1.shape[0]
    HW = H * W
    M = N * HW

    if use_bf16 is None:
        # bf16 matmul operands only pay off for large contractions (v6e/v7x
        # native 256x256 bf16 MXU); element-wise / stats math stays f32.
        use_bf16 = bool(min(C_in, C_out) >= 256)

    x3 = x_nchw.reshape(N, C_in, HW)          # contiguous reshape: free
    store_h = C_out <= C_in                   # channel-reducing head -> store h
    h_dtype = jnp.bfloat16 if use_bf16 else jnp.float32
    h_item = 2 if use_bf16 else 4

    # ---- VMEM-aware tile sizing (v7x: 64 MiB, v5e/v6e: 128 MiB) -------------
    vmem_cap = _vmem_capacity_bytes()
    vmem_limit = int(vmem_cap * 0.7)
    weight_bytes = 2 * 4 * (C_in * C_out + C_out * C_out + 2 * C_out)  # dbl-buf
    per_lane1 = (2 * 4 * C_in                       # x block, double-buffered
                 + 3 * 4 * C_out                    # h1 / h / h*h intermediates
                 + (2 * h_item * C_out if store_h else 0))   # stored h block
    per_lane2 = (2 * h_item * C_out + 2 * 4 * C_out) if store_h else \
                (2 * 4 * C_in + 3 * 4 * C_out + 2 * 4 * C_out)
    tile_budget = max(int(vmem_limit * 0.8) - weight_bytes, 128 * per_lane1)
    cap1 = min(max(128, tile_budget // per_lane1), 2048)
    cap2 = min(max(128, tile_budget // per_lane2), 4096)

    # ---- pass-1 grid: second parallel axis so 2 TCs (v7x) stay busy ---------
    P = 2 if (N % 2 == 1 and HW % 256 == 0) else 1
    chunk = HW // P
    T1 = _pick_tile(chunk, cap1)
    steps = chunk // T1
    LW = min(128, T1)                         # lane-wise stats accumulator width

    x_spec1 = pl.BlockSpec((1, C_in, T1), lambda n, p, j: (n, 0, p * steps + j))
    w_specs1 = [
        pl.BlockSpec((C_out, C_in), lambda n, p, j: (0, 0)),
        pl.BlockSpec((C_out, 1), lambda n, p, j: (0, 0)),
        pl.BlockSpec((C_out, C_out), lambda n, p, j: (0, 0)),
        pl.BlockSpec((C_out, 1), lambda n, p, j: (0, 0)),
    ]
    stat_spec = pl.BlockSpec((1, 1, C_out, LW), lambda n, p, j: (n, p, 0, 0))
    out_shapes1 = [jax.ShapeDtypeStruct((N, P, C_out, LW), jnp.float32),
                   jax.ShapeDtypeStruct((N, P, C_out, LW), jnp.float32)]
    out_specs1 = [stat_spec, stat_spec]
    if store_h:
        out_shapes1 = [jax.ShapeDtypeStruct((N, C_out, HW), h_dtype)] + out_shapes1
        out_specs1 = [pl.BlockSpec((1, C_out, T1),
                                   lambda n, p, j: (n, 0, p * steps + j))] + out_specs1

    mm_flops = 2 * M * (C_in * C_out + C_out * C_out) + 3 * M * C_out
    wbytes = 4 * (C_in * C_out + C_out * C_out + 2 * C_out)

    res1 = pl.pallas_call(
        _make_stats_kernel(store_h, use_bf16),
        out_shape=tuple(out_shapes1),
        grid_spec=pltpu.PrefetchScalarGridSpec(
            num_scalar_prefetch=0,
            grid=(N, P, steps),
            in_specs=[x_spec1] + w_specs1,
            out_specs=out_specs1,
            scratch_shapes=[pltpu.VMEM((C_out, LW), jnp.float32),
                            pltpu.VMEM((C_out, LW), jnp.float32)],
        ),
        compiler_params=pltpu.CompilerParams(
            dimension_semantics=("parallel", "parallel", "arbitrary"),
            vmem_limit_bytes=vmem_limit),
        cost_estimate=pl.CostEstimate(
            flops=mm_flops + 4 * M * C_out, transcendentals=0,
            bytes_accessed=(4 * M * C_in + wbytes
                            + (M * C_out * h_item if store_h else 0)
                            + 2 * 4 * N * P * C_out * LW)),
    )(x3, w1, b1, w2, b2)

    if store_h:
        h3, s_part, q_part = res1
    else:
        s_part, q_part = res1

    # ---- tiny per-channel glue: biased variance, precombined scale/shift ----
    eps = 1e-5
    s = jnp.sum(s_part, axis=(0, 1, 3))               # (C_out,)
    q = jnp.sum(q_part, axis=(0, 1, 3))
    mean = s / M
    var = jnp.maximum(q / M - mean * mean, 0.0)       # clamp: no negative var
    inv_std = jax.lax.rsqrt(var + eps)
    scale = (gamma * inv_std).reshape(C_out, 1)
    shift = (beta - mean * gamma * inv_std).reshape(C_out, 1)

    # ---- pass 2 --------------------------------------------------------------
    scale_spec2 = pl.BlockSpec((C_out, 1), lambda n, j: (0, 0))
    if store_h:
        T2 = _pick_tile(HW, cap2)
        out_spec2 = pl.BlockSpec((1, C_out, T2), lambda n, j: (n, 0, j))
        out3 = pl.pallas_call(
            _fma_kernel,
            out_shape=jax.ShapeDtypeStruct((N, C_out, HW), jnp.float32),
            grid_spec=pltpu.PrefetchScalarGridSpec(
                num_scalar_prefetch=0,
                grid=(N, HW // T2),
                in_specs=[pl.BlockSpec((1, C_out, T2), lambda n, j: (n, 0, j)),
                          scale_spec2, scale_spec2],
                out_specs=out_spec2,
            ),
            compiler_params=pltpu.CompilerParams(
                dimension_semantics=("parallel", "parallel"),
                vmem_limit_bytes=vmem_limit),
            cost_estimate=pl.CostEstimate(
                flops=2 * M * C_out, transcendentals=0,
                bytes_accessed=M * C_out * (h_item + 4) + 2 * 4 * C_out),
        )(h3, scale, shift)
    else:
        T2 = _pick_tile(HW, cap2)
        out_spec2 = pl.BlockSpec((1, C_out, T2), lambda n, j: (n, 0, j))
        x_spec2 = pl.BlockSpec((1, C_in, T2), lambda n, j: (n, 0, j))
        w_specs2 = [
            pl.BlockSpec((C_out, C_in), lambda n, j: (0, 0)),
            pl.BlockSpec((C_out, 1), lambda n, j: (0, 0)),
            pl.BlockSpec((C_out, C_out), lambda n, j: (0, 0)),
            pl.BlockSpec((C_out, 1), lambda n, j: (0, 0)),
        ]
        out3 = pl.pallas_call(
            _make_bn_recompute_kernel(use_bf16),
            out_shape=jax.ShapeDtypeStruct((N, C_out, HW), jnp.float32),
            grid_spec=pltpu.PrefetchScalarGridSpec(
                num_scalar_prefetch=0,
                grid=(N, HW // T2),
                in_specs=[x_spec2] + w_specs2 + [scale_spec2, scale_spec2],
                out_specs=out_spec2,
            ),
            compiler_params=pltpu.CompilerParams(
                dimension_semantics=("parallel", "parallel"),
                vmem_limit_bytes=vmem_limit),
            cost_estimate=pl.CostEstimate(
                flops=mm_flops + 2 * M * C_out, transcendentals=0,
                bytes_accessed=4 * (M * C_in + M * C_out) + wbytes),
        )(x3, w1, b1, w2, b2, scale, shift)

    return out3.reshape(N, C_out, H, W)       # contiguous reshape: free


# ----------------------------------------------------------------------------
# Parameter init + pure-JAX reference
# ----------------------------------------------------------------------------
def init_params(key, c_in, c_out):
    """Deterministic init mirroring weights_init_kaiming + PyTorch defaults.
    Weights are kept in PyTorch 1x1-conv matrix layout: (C_out, C_in)."""
    k1, k2, k3, k4 = jax.random.split(key, 4)
    w1 = jax.random.normal(k1, (c_out, c_in), jnp.float32) * jnp.sqrt(2.0 / c_in)
    w2 = jax.random.normal(k2, (c_out, c_out), jnp.float32) * jnp.sqrt(2.0 / c_out)
    b1 = jax.random.uniform(k3, (c_out, 1), jnp.float32,
                            -1.0 / jnp.sqrt(c_in), 1.0 / jnp.sqrt(c_in))
    b2 = jax.random.uniform(k4, (c_out, 1), jnp.float32,
                            -1.0 / jnp.sqrt(c_out), 1.0 / jnp.sqrt(c_out))
    gamma = jnp.ones((c_out,), jnp.float32)   # BatchNorm2d default init
    beta = jnp.zeros((c_out,), jnp.float32)
    return w1, b1, w2, b2, gamma, beta


def encoder_reference(x, w1, b1, w2, b2, gamma, beta, eps=1e-5):
    """Pure-JAX reference of the same forward (NCHW in / NCHW out)."""
    N, C_in, H, W = x.shape
    C_out = w1.shape[0]
    hi = jax.lax.Precision.HIGHEST
    x2 = jnp.transpose(x, (0, 2, 3, 1)).reshape(-1, C_in)      # (M, C_in)
    h = jnp.maximum(jnp.dot(x2, w1.T, precision=hi) + b1.reshape(-1), 0.0)
    h = jnp.maximum(jnp.dot(h, w2.T, precision=hi) + b2.reshape(-1), 0.0)
    mean = h.mean(axis=0)
    var = h.var(axis=0)                                         # biased
    out = (h - mean) * jax.lax.rsqrt(var + eps) * gamma + beta
    return jnp.transpose(out.reshape(N, H, W, C_out), (0, 3, 1, 2))


if __name__ == "__main__":
    key = jax.random.PRNGKey(0)

    def run_case(case_key, n, c_in, c_out, h, w, tol):
        kx, kp = jax.random.split(case_key)
        x = jax.random.normal(kx, (n, c_in, h, w), jnp.float32)
        params = init_params(kp, c_in, c_out)
        out = encoder_forward(x, *params)
        jax.block_until_ready(out)
        ref = encoder_reference(x, *params)
        assert out.shape == (n, c_out, h, w)
        err = float(jnp.max(jnp.abs(out - ref)))
        assert err < tol, (
            f"max abs err {err} >= {tol} for (N,Cin,Cout,H,W)={(n, c_in, c_out, h, w)}")

    k1, k2, k3 = jax.random.split(key, 3)
    # channel-expanding head -> recompute path, VPU broadcast-FMA matmuls
    run_case(k1, 2, 4, 8, 16, 16, 2e-3)
    # channel-reducing head -> store-h path; odd batch -> chunked stats (P=2)
    run_case(k2, 1, 8, 4, 16, 32, 2e-3)
    # larger channel counts -> MXU matmul path + store-h FMA pass 2
    run_case(k3, 2, 128, 64, 16, 16, 5e-2)

    print("KERNEL_OK")
</pallas_src>

<mosaic_0001>
module attributes {stable_mosaic.version = 11 : i64} {
  func.func @kernel(%arg0: i32, %arg1: i32, %arg2: i32, %arg3: memref<1x4x256xf32, #tpu.memory_space<vmem>>, %arg4: memref<8x4xf32, #tpu.memory_space<vmem>>, %arg5: memref<8x1xf32, #tpu.memory_space<vmem>>, %arg6: memref<8x8xf32, #tpu.memory_space<vmem>>, %arg7: memref<8x1xf32, #tpu.memory_space<vmem>>, %arg8: memref<1x1x8x128xf32, #tpu.memory_space<vmem>>, %arg9: memref<1x1x8x128xf32, #tpu.memory_space<vmem>>, %arg10: memref<8x128xf32, #tpu.memory_space<vmem>>, %arg11: memref<8x128xf32, #tpu.memory_space<vmem>>) attributes {dimension_semantics = [#tpu.dimension_semantics<parallel>, #tpu.dimension_semantics<parallel>, #tpu.dimension_semantics<arbitrary>], iteration_bounds = array<i64: 2, 1, 1>, scalar_prefetch = 0 : i64, scratch_operands = 2 : i64, tpu.core_type = #tpu.core_type<tc>, window_params = [{transform_indices = @transform_0, window_bounds = array<i64: 1, 4, 256>}, {pipeline_mode = #tpu.pipeline_mode<synchronous>, transform_indices = @transform_1, window_bounds = array<i64: 8, 4>}, {pipeline_mode = #tpu.pipeline_mode<synchronous>, transform_indices = @transform_2, window_bounds = array<i64: 8, 1>}, {pipeline_mode = #tpu.pipeline_mode<synchronous>, transform_indices = @transform_3, window_bounds = array<i64: 8, 8>}, {pipeline_mode = #tpu.pipeline_mode<synchronous>, transform_indices = @transform_4, window_bounds = array<i64: 8, 1>}, {transform_indices = @transform_5, window_bounds = array<i64: 1, 1, 8, 128>}, {transform_indices = @transform_6, window_bounds = array<i64: 1, 1, 8, 128>}]} {
    %c0_i32 = arith.constant 0 : i32
    %0 = arith.cmpi eq, %arg2, %c0_i32 : i32
    %1 = arith.extui %0 : i1 to i32
    %c0_i32_0 = arith.constant 0 : i32
    %2 = arith.cmpi ne, %1, %c0_i32_0 : i32
    scf.if %2 {
      %cst_30 = arith.constant 0.000000e+00 : f32
      %107 = vector.broadcast %cst_30 : f32 to vector<8x128xf32>
      %c0_31 = arith.constant 0 : index
      %c0_32 = arith.constant 0 : index
      %108 = vector.load %arg10[%c0_31, %c0_32] : memref<8x128xf32, #tpu.memory_space<vmem>>, vector<8x128xf32>
      tpu.vector_store %arg10[%c0_31, %c0_32], %107 {strides = array<i32>} : memref<8x128xf32, #tpu.memory_space<vmem>>, vector<8x128xf32>,
      %cst_33 = arith.constant 0.000000e+00 : f32
      %109 = vector.broadcast %cst_33 : f32 to vector<8x128xf32>
      %c0_34 = arith.constant 0 : index
      %c0_35 = arith.constant 0 : index
      %110 = vector.load %arg11[%c0_34, %c0_35] : memref<8x128xf32, #tpu.memory_space<vmem>>, vector<8x128xf32>
      tpu.vector_store %arg11[%c0_34, %c0_35], %109 {strides = array<i32>} : memref<8x128xf32, #tpu.memory_space<vmem>>, vector<8x128xf32>,
    } else {
    }
    %c0 = arith.constant 0 : index
    %c0_1 = arith.constant 0 : index
    %c0_2 = arith.constant 0 : index
    %3 = vector.load %arg3[%c0, %c0_1, %c0_2] : memref<1x4x256xf32, #tpu.memory_space<vmem>>, vector<1x4x256xf32>
    %4 = vector.shape_cast %3 : vector<1x4x256xf32> to vector<4x256xf32>
    %c0_3 = arith.constant 0 : index
    %c0_4 = arith.constant 0 : index
    %5 = vector.load %arg4[%c0_3, %c0_4] : memref<8x4xf32, #tpu.memory_space<vmem>>, vector<8x4xf32>
    %c0_5 = arith.constant 0 : index
    %c0_6 = arith.constant 0 : index
    %6 = vector.load %arg5[%c0_5, %c0_6] : memref<8x1xf32, #tpu.memory_space<vmem>>, vector<8x1xf32>
    %c0_7 = arith.constant 0 : index
    %c0_8 = arith.constant 0 : index
    %7 = vector.load %arg6[%c0_7, %c0_8] : memref<8x8xf32, #tpu.memory_space<vmem>>, vector<8x8xf32>
    %c0_9 = arith.constant 0 : index
    %c0_10 = arith.constant 0 : index
    %8 = vector.load %arg7[%c0_9, %c0_10] : memref<8x1xf32, #tpu.memory_space<vmem>>, vector<8x1xf32>
    %9 = vector.extract_strided_slice %5 {offsets = [0, 0], sizes = [8, 1], strides = [1, 1]} : vector<8x4xf32> to vector<8x1xf32>
    %10 = vector.extract_strided_slice %4 {offsets = [0, 0], sizes = [1, 256], strides = [1, 1]} : vector<4x256xf32> to vector<1x256xf32>
    %11 = vector.broadcast %9 : vector<8x1xf32> to vector<8x256xf32>
    %12 = vector.broadcast %10 : vector<1x256xf32> to vector<8x256xf32>
    %13 = arith.mulf %11, %12 : vector<8x256xf32>
    %14 = vector.extract_strided_slice %5 {offsets = [0, 1], sizes = [8, 1], strides = [1, 1]} : vector<8x4xf32> to vector<8x1xf32>
    %15 = vector.extract_strided_slice %4 {offsets = [1, 0], sizes = [1, 256], strides = [1, 1]} : vector<4x256xf32> to vector<1x256xf32>
    %16 = vector.broadcast %14 : vector<8x1xf32> to vector<8x256xf32>
    %17 = vector.broadcast %15 : vector<1x256xf32> to vector<8x256xf32>
    %18 = arith.mulf %16, %17 : vector<8x256xf32>
    %19 = arith.addf %13, %18 : vector<8x256xf32>
    %20 = vector.extract_strided_slice %5 {offsets = [0, 2], sizes = [8, 1], strides = [1, 1]} : vector<8x4xf32> to vector<8x1xf32>
    %21 = vector.extract_strided_slice %4 {offsets = [2, 0], sizes = [1, 256], strides = [1, 1]} : vector<4x256xf32> to vector<1x256xf32>
    %22 = vector.broadcast %20 : vector<8x1xf32> to vector<8x256xf32>
    %23 = vector.broadcast %21 : vector<1x256xf32> to vector<8x256xf32>
    %24 = arith.mulf %22, %23 : vector<8x256xf32>
    %25 = arith.addf %19, %24 : vector<8x256xf32>
    %26 = vector.extract_strided_slice %5 {offsets = [0, 3], sizes = [8, 1], strides = [1, 1]} : vector<8x4xf32> to vector<8x1xf32>
    %27 = vector.extract_strided_slice %4 {offsets = [3, 0], sizes = [1, 256], strides = [1, 1]} : vector<4x256xf32> to vector<1x256xf32>
    %28 = vector.broadcast %26 : vector<8x1xf32> to vector<8x256xf32>
    %29 = vector.broadcast %27 : vector<1x256xf32> to vector<8x256xf32>
    %30 = arith.mulf %28, %29 : vector<8x256xf32>
    %31 = arith.addf %25, %30 : vector<8x256xf32>
    %32 = vector.broadcast %6 : vector<8x1xf32> to vector<8x256xf32>
    %33 = arith.addf %31, %32 : vector<8x256xf32>
    %cst = arith.constant 0.000000e+00 : f32
    %34 = vector.broadcast %cst : f32 to vector<8x256xf32>
    %35 = arith.maximumf %33, %34 : vector<8x256xf32>
    %36 = vector.extract_strided_slice %7 {offsets = [0, 0], sizes = [8, 1], strides = [1, 1]} : vector<8x8xf32> to vector<8x1xf32>
    %37 = vector.extract_strided_slice %35 {offsets = [0, 0], sizes = [1, 256], strides = [1, 1]} : vector<8x256xf32> to vector<1x256xf32>
    %38 = vector.broadcast %36 : vector<8x1xf32> to vector<8x256xf32>
    %39 = vector.broadcast %37 : vector<1x256xf32> to vector<8x256xf32>
    %40 = arith.mulf %38, %39 : vector<8x256xf32>
    %41 = vector.extract_strided_slice %7 {offsets = [0, 1], sizes = [8, 1], strides = [1, 1]} : vector<8x8xf32> to vector<8x1xf32>
    %42 = vector.extract_strided_slice %35 {offsets = [1, 0], sizes = [1, 256], strides = [1, 1]} : vector<8x256xf32> to vector<1x256xf32>
    %43 = vector.broadcast %41 : vector<8x1xf32> to vector<8x256xf32>
    %44 = vector.broadcast %42 : vector<1x256xf32> to vector<8x256xf32>
    %45 = arith.mulf %43, %44 : vector<8x256xf32>
    %46 = arith.addf %40, %45 : vector<8x256xf32>
    %47 = vector.extract_strided_slice %7 {offsets = [0, 2], sizes = [8, 1], strides = [1, 1]} : vector<8x8xf32> to vector<8x1xf32>
    %48 = vector.extract_strided_slice %35 {offsets = [2, 0], sizes = [1, 256], strides = [1, 1]} : vector<8x256xf32> to vector<1x256xf32>
    %49 = vector.broadcast %47 : vector<8x1xf32> to vector<8x256xf32>
    %50 = vector.broadcast %48 : vector<1x256xf32> to vector<8x256xf32>
    %51 = arith.mulf %49, %50 : vector<8x256xf32>
    %52 = arith.addf %46, %51 : vector<8x256xf32>
    %53 = vector.extract_strided_slice %7 {offsets = [0, 3], sizes = [8, 1], strides = [1, 1]} : vector<8x8xf32> to vector<8x1xf32>
    %54 = vector.extract_strided_slice %35 {offsets = [3, 0], sizes = [1, 256], strides = [1, 1]} : vector<8x256xf32> to vector<1x256xf32>
    %55 = vector.broadcast %53 : vector<8x1xf32> to vector<8x256xf32>
    %56 = vector.broadcast %54 : vector<1x256xf32> to vector<8x256xf32>
    %57 = arith.mulf %55, %56 : vector<8x256xf32>
    %58 = arith.addf %52, %57 : vector<8x256xf32>
    %59 = vector.extract_strided_slice %7 {offsets = [0, 4], sizes = [8, 1], strides = [1, 1]} : vector<8x8xf32> to vector<8x1xf32>
    %60 = vector.extract_strided_slice %35 {offsets = [4, 0], sizes = [1, 256], strides = [1, 1]} : vector<8x256xf32> to vector<1x256xf32>
    %61 = vector.broadcast %59 : vector<8x1xf32> to vector<8x256xf32>
    %62 = vector.broadcast %60 : vector<1x256xf32> to vector<8x256xf32>
    %63 = arith.mulf %61, %62 : vector<8x256xf32>
    %64 = arith.addf %58, %63 : vector<8x256xf32>
    %65 = vector.extract_strided_slice %7 {offsets = [0, 5], sizes = [8, 1], strides = [1, 1]} : vector<8x8xf32> to vector<8x1xf32>
    %66 = vector.extract_strided_slice %35 {offsets = [5, 0], sizes = [1, 256], strides = [1, 1]} : vector<8x256xf32> to vector<1x256xf32>
    %67 = vector.broadcast %65 : vector<8x1xf32> to vector<8x256xf32>
    %68 = vector.broadcast %66 : vector<1x256xf32> to vector<8x256xf32>
    %69 = arith.mulf %67, %68 : vector<8x256xf32>
    %70 = arith.addf %64, %69 : vector<8x256xf32>
    %71 = vector.extract_strided_slice %7 {offsets = [0, 6], sizes = [8, 1], strides = [1, 1]} : vector<8x8xf32> to vector<8x1xf32>
    %72 = vector.extract_strided_slice %35 {offsets = [6, 0], sizes = [1, 256], strides = [1, 1]} : vector<8x256xf32> to vector<1x256xf32>
    %73 = vector.broadcast %71 : vector<8x1xf32> to vector<8x256xf32>
    %74 = vector.broadcast %72 : vector<1x256xf32> to vector<8x256xf32>
    %75 = arith.mulf %73, %74 : vector<8x256xf32>
    %76 = arith.addf %70, %75 : vector<8x256xf32>
    %77 = vector.extract_strided_slice %7 {offsets = [0, 7], sizes = [8, 1], strides = [1, 1]} : vector<8x8xf32> to vector<8x1xf32>
    %78 = vector.extract_strided_slice %35 {offsets = [7, 0], sizes = [1, 256], strides = [1, 1]} : vector<8x256xf32> to vector<1x256xf32>
    %79 = vector.broadcast %77 : vector<8x1xf32> to vector<8x256xf32>
    %80 = vector.broadcast %78 : vector<1x256xf32> to vector<8x256xf32>
    %81 = arith.mulf %79, %80 : vector<8x256xf32>
    %82 = arith.addf %76, %81 : vector<8x256xf32>
    %83 = vector.broadcast %8 : vector<8x1xf32> to vector<8x256xf32>
    %84 = arith.addf %82, %83 : vector<8x256xf32>
    %cst_11 = arith.constant 0.000000e+00 : f32
    %85 = vector.broadcast %cst_11 : f32 to vector<8x256xf32>
    %86 = arith.maximumf %84, %85 : vector<8x256xf32>
    %87 = arith.mulf %86, %86 : vector<8x256xf32>
    %c0_12 = arith.constant 0 : index
    %c0_13 = arith.constant 0 : index
    %88 = vector.load %arg10[%c0_12, %c0_13] : memref<8x128xf32, #tpu.memory_space<vmem>>, vector<8x128xf32>
    %89 = vector.extract_strided_slice %86 {offsets = [0, 0], sizes = [8, 128], strides = [1, 1]} : vector<8x256xf32> to vector<8x128xf32>
    %90 = arith.addf %88, %89 : vector<8x128xf32>
    %c0_14 = arith.constant 0 : index
    %c0_15 = arith.constant 0 : index
    %91 = vector.load %arg10[%c0_14, %c0_15] : memref<8x128xf32, #tpu.memory_space<vmem>>, vector<8x128xf32>
    tpu.vector_store %arg10[%c0_14, %c0_15], %90 {strides = array<i32>} : memref<8x128xf32, #tpu.memory_space<vmem>>, vector<8x128xf32>,
    %c0_16 = arith.constant 0 : index
    %c0_17 = arith.constant 0 : index
    %92 = vector.load %arg11[%c0_16, %c0_17] : memref<8x128xf32, #tpu.memory_space<vmem>>, vector<8x128xf32>
    %93 = vector.extract_strided_slice %87 {offsets = [0, 0], sizes = [8, 128], strides = [1, 1]} : vector<8x256xf32> to vector<8x128xf32>
    %94 = arith.addf %92, %93 : vector<8x128xf32>
    %c0_18 = arith.constant 0 : index
    %c0_19 = arith.constant 0 : index
    %95 = vector.load %arg11[%c0_18, %c0_19] : memref<8x128xf32, #tpu.memory_space<vmem>>, vector<8x128xf32>
    tpu.vector_store %arg11[%c0_18, %c0_19], %94 {strides = array<i32>} : memref<8x128xf32, #tpu.memory_space<vmem>>, vector<8x128xf32>,
    %c0_20 = arith.constant 0 : index
    %c0_21 = arith.constant 0 : index
    %96 = vector.load %arg10[%c0_20, %c0_21] : memref<8x128xf32, #tpu.memory_space<vmem>>, vector<8x128xf32>
    %97 = vector.extract_strided_slice %86 {offsets = [0, 128], sizes = [8, 128], strides = [1, 1]} : vector<8x256xf32> to vector<8x128xf32>
    %98 = arith.addf %96, %97 : vector<8x128xf32>
    %c0_22 = arith.constant 0 : index
    %c0_23 = arith.constant 0 : index
    %99 = vector.load %arg10[%c0_22, %c0_23] : memref<8x128xf32, #tpu.memory_space<vmem>>, vector<8x128xf32>
    tpu.vector_store %arg10[%c0_22, %c0_23], %98 {strides = array<i32>} : memref<8x128xf32, #tpu.memory_space<vmem>>, vector<8x128xf32>,
    %c0_24 = arith.constant 0 : index
    %c0_25 = arith.constant 0 : index
    %100 = vector.load %arg11[%c0_24, %c0_25] : memref<8x128xf32, #tpu.memory_space<vmem>>, vector<8x128xf32>
    %101 = vector.extract_strided_slice %87 {offsets = [0, 128], sizes = [8, 128], strides = [1, 1]} : vector<8x256xf32> to vector<8x128xf32>
    %102 = arith.addf %100, %101 : vector<8x128xf32>
    %c0_26 = arith.constant 0 : index
    %c0_27 = arith.constant 0 : index
    %103 = vector.load %arg11[%c0_26, %c0_27] : memref<8x128xf32, #tpu.memory_space<vmem>>, vector<8x128xf32>
    tpu.vector_store %arg11[%c0_26, %c0_27], %102 {strides = array<i32>} : memref<8x128xf32, #tpu.memory_space<vmem>>, vector<8x128xf32>,
    %c0_i32_28 = arith.constant 0 : i32
    %104 = arith.cmpi eq, %arg2, %c0_i32_28 : i32
    %105 = arith.extui %104 : i1 to i32
    %c0_i32_29 = arith.constant 0 : i32
    %106 = arith.cmpi ne, %105, %c0_i32_29 : i32
    scf.if %106 {
      %c0_30 = arith.constant 0 : index
      %c0_31 = arith.constant 0 : index
      %107 = vector.load %arg10[%c0_30, %c0_31] : memref<8x128xf32, #tpu.memory_space<vmem>>, vector<8x128xf32>
      %c0_32 = arith.constant 0 : index
      %c0_33 = arith.constant 0 : index
      %c0_34 = arith.constant 0 : index
      %c0_35 = arith.constant 0 : index
      %108 = vector.load %arg8[%c0_32, %c0_33, %c0_34, %c0_35] : memref<1x1x8x128xf32, #tpu.memory_space<vmem>>, vector<1x1x8x128xf32>
      %109 = vector.shape_cast %108 : vector<1x1x8x128xf32> to vector<8x128xf32>
      %110 = vector.shape_cast %107 : vector<8x128xf32> to vector<1x1x8x128xf32>
      tpu.vector_store %arg8[%c0_32, %c0_33, %c0_34, %c0_35], %110 {strides = array<i32>} : memref<1x1x8x128xf32, #tpu.memory_space<vmem>>, vector<1x1x8x128xf32>,
      %c0_36 = arith.constant 0 : index
      %c0_37 = arith.constant 0 : index
      %111 = vector.load %arg11[%c0_36, %c0_37] : memref<8x128xf32, #tpu.memory_space<vmem>>, vector<8x128xf32>
      %c0_38 = arith.constant 0 : index
      %c0_39 = arith.constant 0 : index
      %c0_40 = arith.constant 0 : index
      %c0_41 = arith.constant 0 : index
      %112 = vector.load %arg9[%c0_38, %c0_39, %c0_40, %c0_41] : memref<1x1x8x128xf32, #tpu.memory_space<vmem>>, vector<1x1x8x128xf32>
      %113 = vector.shape_cast %112 : vector<1x1x8x128xf32> to vector<8x128xf32>
      %114 = vector.shape_cast %111 : vector<8x128xf32> to vector<1x1x8x128xf32>
      tpu.vector_store %arg9[%c0_38, %c0_39, %c0_40, %c0_41], %114 {strides = array<i32>} : memref<1x1x8x128xf32, #tpu.memory_space<vmem>>, vector<1x1x8x128xf32>,
    } else {
    }
    return
  }
  func.func @transform_0(%arg0: i32, %arg1: i32, %arg2: i32) -> (i32, i32, i32) {
    %c1_i32 = arith.constant 1 : i32
    %0 = arith.muli %arg1, %c1_i32 : i32
    %1 = arith.addi %0, %arg2 : i32
    %c0_i32 = arith.constant 0 : i32
    %c0_i32_0 = arith.constant 0 : i32
    return %arg0, %c0_i32, %1 : i32, i32, i32
  }
  func.func @transform_1(%arg0: i32, %arg1: i32, %arg2: i32) -> (i32, i32) {
    %c0_i32 = arith.constant 0 : i32
    %c0_i32_0 = arith.constant 0 : i32
    %c0_i32_1 = arith.constant 0 : i32
    return %c0_i32, %c0_i32_0 : i32, i32
  }
  func.func @transform_2(%arg0: i32, %arg1: i32, %arg2: i32) -> (i32, i32) {
    %c0_i32 = arith.constant 0 : i32
    %c0_i32_0 = arith.constant 0 : i32
    %c0_i32_1 = arith.constant 0 : i32
    return %c0_i32, %c0_i32_0 : i32, i32
  }
  func.func @transform_3(%arg0: i32, %arg1: i32, %arg2: i32) -> (i32, i32) {
    %c0_i32 = arith.constant 0 : i32
    %c0_i32_0 = arith.constant 0 : i32
    %c0_i32_1 = arith.constant 0 : i32
    return %c0_i32, %c0_i32_0 : i32, i32
  }
  func.func @transform_4(%arg0: i32, %arg1: i32, %arg2: i32) -> (i32, i32) {
    %c0_i32 = arith.constant 0 : i32
    %c0_i32_0 = arith.constant 0 : i32
    %c0_i32_1 = arith.constant 0 : i32
    return %c0_i32, %c0_i32_0 : i32, i32
  }
  func.func @transform_5(%arg0: i32, %arg1: i32, %arg2: i32) -> (i32, i32, i32, i32) {
    %c0_i32 = arith.constant 0 : i32
    %c0_i32_0 = arith.constant 0 : i32
    %c0_i32_1 = arith.constant 0 : i32
    return %arg0, %arg1, %c0_i32, %c0_i32_0 : i32, i32, i32, i32
  }
  func.func @transform_6(%arg0: i32, %arg1: i32, %arg2: i32) -> (i32, i32, i32, i32) {
    %c0_i32 = arith.constant 0 : i32
    %c0_i32_0 = arith.constant 0 : i32
    %c0_i32_1 = arith.constant 0 : i32
    return %arg0, %arg1, %c0_i32, %c0_i32_0 : i32, i32, i32, i32
  }
}

module attributes {stable_mosaic.version = 11 : i64} {
  func.func @kernel(%arg0: i32, %arg1: i32, %arg2: memref<1x4x256xf32, #tpu.memory_space<vmem>>, %arg3: memref<8x4xf32, #tpu.memory_space<vmem>>, %arg4: memref<8x1xf32, #tpu.memory_space<vmem>>, %arg5: memref<8x8xf32, #tpu.memory_space<vmem>>, %arg6: memref<8x1xf32, #tpu.memory_space<vmem>>, %arg7: memref<8x1xf32, #tpu.memory_space<vmem>>, %arg8: memref<8x1xf32, #tpu.memory_space<vmem>>, %arg9: memref<1x8x256xf32, #tpu.memory_space<vmem>>) attributes {dimension_semantics = [#tpu.dimension_semantics<parallel>, #tpu.dimension_semantics<parallel>], iteration_bounds = array<i64: 2, 1>, scalar_prefetch = 0 : i64, scratch_operands = 0 : i64, tpu.core_type = #tpu.core_type<tc>, window_params = [{transform_indices = @transform_0, window_bounds = array<i64: 1, 4, 256>}, {pipeline_mode = #tpu.pipeline_mode<synchronous>, transform_indices = @transform_1, window_bounds = array<i64: 8, 4>}, {pipeline_mode = #tpu.pipeline_mode<synchronous>, transform_indices = @transform_2, window_bounds = array<i64: 8, 1>}, {pipeline_mode = #tpu.pipeline_mode<synchronous>, transform_indices = @transform_3, window_bounds = array<i64: 8, 8>}, {pipeline_mode = #tpu.pipeline_mode<synchronous>, transform_indices = @transform_4, window_bounds = array<i64: 8, 1>}, {pipeline_mode = #tpu.pipeline_mode<synchronous>, transform_indices = @transform_5, window_bounds = array<i64: 8, 1>}, {pipeline_mode = #tpu.pipeline_mode<synchronous>, transform_indices = @transform_6, window_bounds = array<i64: 8, 1>}, {transform_indices = @transform_7, window_bounds = array<i64: 1, 8, 256>}]} {
    %c0 = arith.constant 0 : index
    %c0_0 = arith.constant 0 : index
    %c0_1 = arith.constant 0 : index
    %0 = vector.load %arg2[%c0, %c0_0, %c0_1] : memref<1x4x256xf32, #tpu.memory_space<vmem>>, vector<1x4x256xf32>
    %1 = vector.shape_cast %0 : vector<1x4x256xf32> to vector<4x256xf32>
    %c0_2 = arith.constant 0 : index
    %c0_3 = arith.constant 0 : index
    %2 = vector.load %arg3[%c0_2, %c0_3] : memref<8x4xf32, #tpu.memory_space<vmem>>, vector<8x4xf32>
    %c0_4 = arith.constant 0 : index
    %c0_5 = arith.constant 0 : index
    %3 = vector.load %arg4[%c0_4, %c0_5] : memref<8x1xf32, #tpu.memory_space<vmem>>, vector<8x1xf32>
    %c0_6 = arith.constant 0 : index
    %c0_7 = arith.constant 0 : index
    %4 = vector.load %arg5[%c0_6, %c0_7] : memref<8x8xf32, #tpu.memory_space<vmem>>, vector<8x8xf32>
    %c0_8 = arith.constant 0 : index
    %c0_9 = arith.constant 0 : index
    %5 = vector.load %arg6[%c0_8, %c0_9] : memref<8x1xf32, #tpu.memory_space<vmem>>, vector<8x1xf32>
    %6 = vector.extract_strided_slice %2 {offsets = [0, 0], sizes = [8, 1], strides = [1, 1]} : vector<8x4xf32> to vector<8x1xf32>
    %7 = vector.extract_strided_slice %1 {offsets = [0, 0], sizes = [1, 256], strides = [1, 1]} : vector<4x256xf32> to vector<1x256xf32>
    %8 = vector.broadcast %6 : vector<8x1xf32> to vector<8x256xf32>
    %9 = vector.broadcast %7 : vector<1x256xf32> to vector<8x256xf32>
    %10 = arith.mulf %8, %9 : vector<8x256xf32>
    %11 = vector.extract_strided_slice %2 {offsets = [0, 1], sizes = [8, 1], strides = [1, 1]} : vector<8x4xf32> to vector<8x1xf32>
    %12 = vector.extract_strided_slice %1 {offsets = [1, 0], sizes = [1, 256], strides = [1, 1]} : vector<4x256xf32> to vector<1x256xf32>
    %13 = vector.broadcast %11 : vector<8x1xf32> to vector<8x256xf32>
    %14 = vector.broadcast %12 : vector<1x256xf32> to vector<8x256xf32>
    %15 = arith.mulf %13, %14 : vector<8x256xf32>
    %16 = arith.addf %10, %15 : vector<8x256xf32>
    %17 = vector.extract_strided_slice %2 {offsets = [0, 2], sizes = [8, 1], strides = [1, 1]} : vector<8x4xf32> to vector<8x1xf32>
    %18 = vector.extract_strided_slice %1 {offsets = [2, 0], sizes = [1, 256], strides = [1, 1]} : vector<4x256xf32> to vector<1x256xf32>
    %19 = vector.broadcast %17 : vector<8x1xf32> to vector<8x256xf32>
    %20 = vector.broadcast %18 : vector<1x256xf32> to vector<8x256xf32>
    %21 = arith.mulf %19, %20 : vector<8x256xf32>
    %22 = arith.addf %16, %21 : vector<8x256xf32>
    %23 = vector.extract_strided_slice %2 {offsets = [0, 3], sizes = [8, 1], strides = [1, 1]} : vector<8x4xf32> to vector<8x1xf32>
    %24 = vector.extract_strided_slice %1 {offsets = [3, 0], sizes = [1, 256], strides = [1, 1]} : vector<4x256xf32> to vector<1x256xf32>
    %25 = vector.broadcast %23 : vector<8x1xf32> to vector<8x256xf32>
    %26 = vector.broadcast %24 : vector<1x256xf32> to vector<8x256xf32>
    %27 = arith.mulf %25, %26 : vector<8x256xf32>
    %28 = arith.addf %22, %27 : vector<8x256xf32>
    %29 = vector.broadcast %3 : vector<8x1xf32> to vector<8x256xf32>
    %30 = arith.addf %28, %29 : vector<8x256xf32>
    %cst = arith.constant 0.000000e+00 : f32
    %31 = vector.broadcast %cst : f32 to vector<8x256xf32>
    %32 = arith.maximumf %30, %31 : vector<8x256xf32>
    %33 = vector.extract_strided_slice %4 {offsets = [0, 0], sizes = [8, 1], strides = [1, 1]} : vector<8x8xf32> to vector<8x1xf32>
    %34 = vector.extract_strided_slice %32 {offsets = [0, 0], sizes = [1, 256], strides = [1, 1]} : vector<8x256xf32> to vector<1x256xf32>
    %35 = vector.broadcast %33 : vector<8x1xf32> to vector<8x256xf32>
    %36 = vector.broadcast %34 : vector<1x256xf32> to vector<8x256xf32>
    %37 = arith.mulf %35, %36 : vector<8x256xf32>
    %38 = vector.extract_strided_slice %4 {offsets = [0, 1], sizes = [8, 1], strides = [1, 1]} : vector<8x8xf32> to vector<8x1xf32>
    %39 = vector.extract_strided_slice %32 {offsets = [1, 0], sizes = [1, 256], strides = [1, 1]} : vector<8x256xf32> to vector<1x256xf32>
    %40 = vector.broadcast %38 : vector<8x1xf32> to vector<8x256xf32>
    %41 = vector.broadcast %39 : vector<1x256xf32> to vector<8x256xf32>
    %42 = arith.mulf %40, %41 : vector<8x256xf32>
    %43 = arith.addf %37, %42 : vector<8x256xf32>
    %44 = vector.extract_strided_slice %4 {offsets = [0, 2], sizes = [8, 1], strides = [1, 1]} : vector<8x8xf32> to vector<8x1xf32>
    %45 = vector.extract_strided_slice %32 {offsets = [2, 0], sizes = [1, 256], strides = [1, 1]} : vector<8x256xf32> to vector<1x256xf32>
    %46 = vector.broadcast %44 : vector<8x1xf32> to vector<8x256xf32>
    %47 = vector.broadcast %45 : vector<1x256xf32> to vector<8x256xf32>
    %48 = arith.mulf %46, %47 : vector<8x256xf32>
    %49 = arith.addf %43, %48 : vector<8x256xf32>
    %50 = vector.extract_strided_slice %4 {offsets = [0, 3], sizes = [8, 1], strides = [1, 1]} : vector<8x8xf32> to vector<8x1xf32>
    %51 = vector.extract_strided_slice %32 {offsets = [3, 0], sizes = [1, 256], strides = [1, 1]} : vector<8x256xf32> to vector<1x256xf32>
    %52 = vector.broadcast %50 : vector<8x1xf32> to vector<8x256xf32>
    %53 = vector.broadcast %51 : vector<1x256xf32> to vector<8x256xf32>
    %54 = arith.mulf %52, %53 : vector<8x256xf32>
    %55 = arith.addf %49, %54 : vector<8x256xf32>
    %56 = vector.extract_strided_slice %4 {offsets = [0, 4], sizes = [8, 1], strides = [1, 1]} : vector<8x8xf32> to vector<8x1xf32>
    %57 = vector.extract_strided_slice %32 {offsets = [4, 0], sizes = [1, 256], strides = [1, 1]} : vector<8x256xf32> to vector<1x256xf32>
    %58 = vector.broadcast %56 : vector<8x1xf32> to vector<8x256xf32>
    %59 = vector.broadcast %57 : vector<1x256xf32> to vector<8x256xf32>
    %60 = arith.mulf %58, %59 : vector<8x256xf32>
    %61 = arith.addf %55, %60 : vector<8x256xf32>
    %62 = vector.extract_strided_slice %4 {offsets = [0, 5], sizes = [8, 1], strides = [1, 1]} : vector<8x8xf32> to vector<8x1xf32>
    %63 = vector.extract_strided_slice %32 {offsets = [5, 0], sizes = [1, 256], strides = [1, 1]} : vector<8x256xf32> to vector<1x256xf32>
    %64 = vector.broadcast %62 : vector<8x1xf32> to vector<8x256xf32>
    %65 = vector.broadcast %63 : vector<1x256xf32> to vector<8x256xf32>
    %66 = arith.mulf %64, %65 : vector<8x256xf32>
    %67 = arith.addf %61, %66 : vector<8x256xf32>
    %68 = vector.extract_strided_slice %4 {offsets = [0, 6], sizes = [8, 1], strides = [1, 1]} : vector<8x8xf32> to vector<8x1xf32>
    %69 = vector.extract_strided_slice %32 {offsets = [6, 0], sizes = [1, 256], strides = [1, 1]} : vector<8x256xf32> to vector<1x256xf32>
    %70 = vector.broadcast %68 : vector<8x1xf32> to vector<8x256xf32>
    %71 = vector.broadcast %69 : vector<1x256xf32> to vector<8x256xf32>
    %72 = arith.mulf %70, %71 : vector<8x256xf32>
    %73 = arith.addf %67, %72 : vector<8x256xf32>
    %74 = vector.extract_strided_slice %4 {offsets = [0, 7], sizes = [8, 1], strides = [1, 1]} : vector<8x8xf32> to vector<8x1xf32>
    %75 = vector.extract_strided_slice %32 {offsets = [7, 0], sizes = [1, 256], strides = [1, 1]} : vector<8x256xf32> to vector<1x256xf32>
    %76 = vector.broadcast %74 : vector<8x1xf32> to vector<8x256xf32>
    %77 = vector.broadcast %75 : vector<1x256xf32> to vector<8x256xf32>
    %78 = arith.mulf %76, %77 : vector<8x256xf32>
    %79 = arith.addf %73, %78 : vector<8x256xf32>
    %80 = vector.broadcast %5 : vector<8x1xf32> to vector<8x256xf32>
    %81 = arith.addf %79, %80 : vector<8x256xf32>
    %cst_10 = arith.constant 0.000000e+00 : f32
    %82 = vector.broadcast %cst_10 : f32 to vector<8x256xf32>
    %83 = arith.maximumf %81, %82 : vector<8x256xf32>
    %c0_11 = arith.constant 0 : index
    %c0_12 = arith.constant 0 : index
    %84 = vector.load %arg7[%c0_11, %c0_12] : memref<8x1xf32, #tpu.memory_space<vmem>>, vector<8x1xf32>
    %85 = vector.broadcast %84 : vector<8x1xf32> to vector<8x256xf32>
    %86 = arith.mulf %83, %85 : vector<8x256xf32>
    %c0_13 = arith.constant 0 : index
    %c0_14 = arith.constant 0 : index
    %87 = vector.load %arg8[%c0_13, %c0_14] : memref<8x1xf32, #tpu.memory_space<vmem>>, vector<8x1xf32>
    %88 = vector.broadcast %87 : vector<8x1xf32> to vector<8x256xf32>
    %89 = arith.addf %86, %88 : vector<8x256xf32>
    %c0_15 = arith.constant 0 : index
    %c0_16 = arith.constant 0 : index
    %c0_17 = arith.constant 0 : index
    %90 = vector.load %arg9[%c0_15, %c0_16, %c0_17] : memref<1x8x256xf32, #tpu.memory_space<vmem>>, vector<1x8x256xf32>
    %91 = vector.shape_cast %90 : vector<1x8x256xf32> to vector<8x256xf32>
    %92 = vector.shape_cast %89 : vector<8x256xf32> to vector<1x8x256xf32>
    tpu.vector_store %arg9[%c0_15, %c0_16, %c0_17], %92 {strides = array<i32>} : memref<1x8x256xf32, #tpu.memory_space<vmem>>, vector<1x8x256xf32>,
    return
  }
  func.func @transform_0(%arg0: i32, %arg1: i32) -> (i32, i32, i32) {
    %c0_i32 = arith.constant 0 : i32
    %c0_i32_0 = arith.constant 0 : i32
    return %arg0, %c0_i32, %arg1 : i32, i32, i32
  }
  func.func @transform_1(%arg0: i32, %arg1: i32) -> (i32, i32) {
    %c0_i32 = arith.constant 0 : i32
    %c0_i32_0 = arith.constant 0 : i32
    %c0_i32_1 = arith.constant 0 : i32
    return %c0_i32, %c0_i32_0 : i32, i32
  }
  func.func @transform_2(%arg0: i32, %arg1: i32) -> (i32, i32) {
    %c0_i32 = arith.constant 0 : i32
    %c0_i32_0 = arith.constant 0 : i32
    %c0_i32_1 = arith.constant 0 : i32
    return %c0_i32, %c0_i32_0 : i32, i32
  }
  func.func @transform_3(%arg0: i32, %arg1: i32) -> (i32, i32) {
    %c0_i32 = arith.constant 0 : i32
    %c0_i32_0 = arith.constant 0 : i32
    %c0_i32_1 = arith.constant 0 : i32
    return %c0_i32, %c0_i32_0 : i32, i32
  }
  func.func @transform_4(%arg0: i32, %arg1: i32) -> (i32, i32) {
    %c0_i32 = arith.constant 0 : i32
    %c0_i32_0 = arith.constant 0 : i32
    %c0_i32_1 = arith.constant 0 : i32
    return %c0_i32, %c0_i32_0 : i32, i32
  }
  func.func @transform_5(%arg0: i32, %arg1: i32) -> (i32, i32) {
    %c0_i32 = arith.constant 0 : i32
    %c0_i32_0 = arith.constant 0 : i32
    %c0_i32_1 = arith.constant 0 : i32
    return %c0_i32, %c0_i32_0 : i32, i32
  }
  func.func @transform_6(%arg0: i32, %arg1: i32) -> (i32, i32) {
    %c0_i32 = arith.constant 0 : i32
    %c0_i32_0 = arith.constant 0 : i32
    %c0_i32_1 = arith.constant 0 : i32
    return %c0_i32, %c0_i32_0 : i32, i32
  }
  func.func @transform_7(%arg0: i32, %arg1: i32) -> (i32, i32, i32) {
    %c0_i32 = arith.constant 0 : i32
    %c0_i32_0 = arith.constant 0 : i32
    return %arg0, %c0_i32, %arg1 : i32, i32, i32
  }
}

</mosaic_0001>

<llo_original>
// kernel: encoder_forward.2
$region0: #{encoder_forward.2}
  #allocation0 [shape = 'u32[]', space=smem, size = 0x4, offset = 0x4, fixed_abs, tag = 'smem constant byte address 0x4 - core index']
  #allocation1 [shape = 'u32[72,128]{1,0:T(1,128)}', space=vmem, size = 0x9000, scoped, tag = 'internal scratch']
  #allocation2 [shape = 'f32[8,128]{1,0:T(8,128)}', space=vmem, size = 0x1000, scoped, tag = 'scratch operand']
  #allocation3 [shape = 'f32[8,128]{1,0:T(8,128)}', space=vmem, size = 0x1000, scoped, tag = 'scratch operand']
  %s0 = inlined_call_operand.vmem [shape: f32[2,4,256], index: 0, kind: input, shape index: {}]
  %s1 = inlined_call_operand.vmem [shape: f32[8,4], index: 1, kind: input, shape index: {}]
  %s2 = inlined_call_operand.vmem [shape: f32[8,1], index: 2, kind: input, shape index: {}]
  %s3 = inlined_call_operand.vmem [shape: f32[8,8], index: 3, kind: input, shape index: {}]
  %s4 = inlined_call_operand.vmem [shape: f32[8,1], index: 4, kind: input, shape index: {}]
  %s5 = inlined_call_operand.vmem [shape: f32[2,1,8,128], index: 5, kind: output, shape index: {0}]
  %s6 = inlined_call_operand.vmem [shape: f32[2,1,8,128], index: 6, kind: output, shape index: {1}]
  %7 = xla_tuple %s5, %s6
  %s8 = sld [smem:[#allocation0]]
  $region69: #{encoder_forward.2} parent=0
    _
  %s10 = ssub.s32 1, %s8
  %s11 = scalar_select 0, %s10, %s8
  loop: start=0, step=1, limit=4
  $region2: #{encoder_forward.2} parent=0 // loop_pre_header
    _
  $region3: #{encoder_forward.2} parent=0 // loop_header
    %s13 = sphi 0, %s17
    %p14 = scmp.ge.s32.totalorder %s13, 4
    %s20 = sphi 0, %s39
    %s21 = sphi 0, %s35
    %s22 = sphi 0, %s31
    %s23 = sphi 0, %s20
    %s24 = sphi 0, %s21
    %s25 = sphi 0, %s22
    %s26 = sphi 0, %s23
    %s27 = sphi 0, %s24
    %s28 = sphi 0, %s25
    %s46 = sphi 0, %s48
    %s49 = sphi 0, %s46
    %s50 = sphi 0, %s49
    %s66 = sphi 0, %s50
    %s70 = sphi 0, %s70
    %s72 = sphi 0, %s70
    %s73 = sphi 0, %s72
    %s87 = sphi 0, %s73
    %s91 = sphi 0, %s91
    %s93 = sphi 0, %s91
    %s94 = sphi 0, %s93
    %s108 = sphi 0, %s94
    %s112 = sphi 0, %s112
    %s114 = sphi 0, %s112
    %s115 = sphi 0, %s114
    %s129 = sphi 0, %s115
    %s133 = sphi 0, %s133
    %s135 = sphi 0, %s133
    %s136 = sphi 0, %s135
    %s150 = sphi 0, %s136
    %s158 = sphi 0, %s160
    %s161 = sphi 0, %s158
    %s162 = sphi 0, %s161
    %s178 = sphi 0, %s162
    %s186 = sphi 0, %s188
    %s189 = sphi 0, %s186
    %s190 = sphi 0, %s189
    %s206 = sphi 0, %s190
  $region4: #{encoder_forward.2} parent=0 // loop_header_branch
    %16 = sbr.rel (%p14) target = $region8
  $region5: #{encoder_forward.2} parent=0 // loop_body
    %s18 = ssub.s32 %s13, 1
    %s19 = ssub.s32 %s13, 2
    %s29 = sadd.s32 1, %s22
    %p30 = scmp.ge.s32.totalorder %s29, 1
    %s31 = scalar_select %p30, 0, %s29
    %s32 = sadd.s32 1, %s21
    %s33 = scalar_select %p30, %s32, %s21
    %p34 = scmp.ge.s32.totalorder %s33, 1
    %s35 = scalar_select %p34, 0, %s33
    %s36 = sadd.s32 1, %s20
    %s37 = scalar_select %p34, %s36, %s20
    %p38 = scmp.ge.s32.totalorder %s37, 2
    %s39 = scalar_select %p38, 0, %s37
    %s40 = sadd.s32 %s21, %s22
    %s41 = sadd.s32 %s35, %s31
    %s42 = ssub.s32 %s20, %s39
    %s43 = ssub.s32 %s40, %s41
    %s44 = sor.u32 %s42, %s43
    %p45 = scmp.eq.s32.totalorder %s44, 0
    %s47 = sadd.s32 %s46, 1
    %s48 = scalar_select %p45, %s46, %s47
    %p51 = pneg %p45
    %p52 = scmp.eq.s32.totalorder %s13, 1
    %p53 = por %p51, %p52
    %p54 = scmp.ne.s32.totalorder %s46, %s49
    %p55 = scmp.eq.s32.totalorder %s13, 0
    %p56 = por %p54, %p55
    %p57 = scmp.ne.s32.totalorder %s46, %s49
    %p58 = scmp.eq.s32.totalorder %s18, 1
    %p59 = por %p57, %p58
    %p60 = scmp.ne.s32.totalorder %s49, %s50
    %p61 = scmp.eq.s32.totalorder %s18, 0
    %p62 = por %p60, %p61
    %p63 = scmp.ne.s32.totalorder %s49, %s50
    %p64 = scmp.eq.s32.totalorder %s19, 1
    %p65 = por %p63, %p64
    %p67 = scmp.ne.s32.totalorder %s50, %s66
    %p68 = scmp.eq.s32.totalorder %s19, 0
    %p69 = por %p67, %p68
    %s71 = sadd.s32 %s70, 1
    %p74 = scmp.eq.s32.totalorder %s13, 1
    %p75 = scmp.ne.s32.totalorder %s70, %s72
    %p76 = scmp.eq.s32.totalorder %s13, 0
    %p77 = por %p75, %p76
    %p78 = scmp.ne.s32.totalorder %s70, %s72
    %p79 = scmp.eq.s32.totalorder %s18, 1
    %p80 = por %p78, %p79
    %p81 = scmp.ne.s32.totalorder %s72, %s73
    %p82 = scmp.eq.s32.totalorder %s18, 0
    %p83 = por %p81, %p82
    %p84 = scmp.ne.s32.totalorder %s72, %s73
    %p85 = scmp.eq.s32.totalorder %s19, 1
    %p86 = por %p84, %p85
    %p88 = scmp.ne.s32.totalorder %s73, %s87
    %p89 = scmp.eq.s32.totalorder %s19, 0
    %p90 = por %p88, %p89
    %s92 = sadd.s32 %s91, 1
    %p95 = scmp.eq.s32.totalorder %s13, 1
    %p96 = scmp.ne.s32.totalorder %s91, %s93
    %p97 = scmp.eq.s32.totalorder %s13, 0
    %p98 = por %p96, %p97
    %p99 = scmp.ne.s32.totalorder %s91, %s93
    %p100 = scmp.eq.s32.totalorder %s18, 1
    %p101 = por %p99, %p100
    %p102 = scmp.ne.s32.totalorder %s93, %s94
    %p103 = scmp.eq.s32.totalorder %s18, 0
    %p104 = por %p102, %p103
    %p105 = scmp.ne.s32.totalorder %s93, %s94
    %p106 = scmp.eq.s32.totalorder %s19, 1
    %p107 = por %p105, %p106
    %p109 = scmp.ne.s32.totalorder %s94, %s108
    %p110 = scmp.eq.s32.totalorder %s19, 0
    %p111 = por %p109, %p110
    %s113 = sadd.s32 %s112, 1
    %p116 = scmp.eq.s32.totalorder %s13, 1
    %p117 = scmp.ne.s32.totalorder %s112, %s114
    %p118 = scmp.eq.s32.totalorder %s13, 0
    %p119 = por %p117, %p118
    %p120 = scmp.ne.s32.totalorder %s112, %s114
    %p121 = scmp.eq.s32.totalorder %s18, 1
    %p122 = por %p120, %p121
    %p123 = scmp.ne.s32.totalorder %s114, %s115
    %p124 = scmp.eq.s32.totalorder %s18, 0
    %p125 = por %p123, %p124
    %p126 = scmp.ne.s32.totalorder %s114, %s115
    %p127 = scmp.eq.s32.totalorder %s19, 1
    %p128 = por %p126, %p127
    %p130 = scmp.ne.s32.totalorder %s115, %s129
    %p131 = scmp.eq.s32.totalorder %s19, 0
    %p132 = por %p130, %p131
    %s134 = sadd.s32 %s133, 1
    %p137 = scmp.eq.s32.totalorder %s13, 1
    %p138 = scmp.ne.s32.totalorder %s133, %s135
    %p139 = scmp.eq.s32.totalorder %s13, 0
    %p140 = por %p138, %p139
    %p141 = scmp.ne.s32.totalorder %s133, %s135
    %p142 = scmp.eq.s32.totalorder %s18, 1
    %p143 = por %p141, %p142
    %p144 = scmp.ne.s32.totalorder %s135, %s136
    %p145 = scmp.eq.s32.totalorder %s18, 0
    %p146 = por %p144, %p145
    %p147 = scmp.ne.s32.totalorder %s135, %s136
    %p148 = scmp.eq.s32.totalorder %s19, 1
    %p149 = por %p147, %p148
    %p151 = scmp.ne.s32.totalorder %s136, %s150
    %p152 = scmp.eq.s32.totalorder %s19, 0
    %p153 = por %p151, %p152
    %s154 = ssub.s32 %s20, %s39
    %s155 = ssub.s32 %s21, %s35
    %s156 = sor.u32 %s154, %s155
    %p157 = scmp.eq.s32.totalorder %s156, 0
    %s159 = sadd.s32 %s158, 1
    %s160 = scalar_select %p157, %s158, %s159
    %p163 = pneg %p157
    %p164 = scmp.eq.s32.totalorder %s13, 1
    %p165 = por %p163, %p164
    %p166 = scmp.ne.s32.totalorder %s158, %s161
    %p167 = scmp.eq.s32.totalorder %s13, 0
    %p168 = por %p166, %p167
    %p169 = scmp.ne.s32.totalorder %s158, %s161
    %p170 = scmp.eq.s32.totalorder %s18, 1
    %p171 = por %p169, %p170
    %p172 = scmp.ne.s32.totalorder %s161, %s162
    %p173 = scmp.eq.s32.totalorder %s18, 0
    %p174 = por %p172, %p173
    %p175 = scmp.ne.s32.totalorder %s161, %s162
    %p176 = scmp.eq.s32.totalorder %s19, 1
    %p177 = por %p175, %p176
    %p179 = scmp.ne.s32.totalorder %s162, %s178
    %p180 = scmp.eq.s32.totalorder %s19, 0
    %p181 = por %p179, %p180
    %s182 = ssub.s32 %s20, %s39
    %s183 = ssub.s32 %s21, %s35
    %s184 = sor.u32 %s182, %s183
    %p185 = scmp.eq.s32.totalorder %s184, 0
    %s187 = sadd.s32 %s186, 1
    %s188 = scalar_select %p185, %s186, %s187
    %p191 = pneg %p185
    %p192 = scmp.eq.s32.totalorder %s13, 1
    %p193 = por %p191, %p192
    %p194 = scmp.ne.s32.totalorder %s186, %s189
    %p195 = scmp.eq.s32.totalorder %s13, 0
    %p196 = por %p194, %p195
    %p197 = scmp.ne.s32.totalorder %s186, %s189
    %p198 = scmp.eq.s32.totalorder %s18, 1
    %p199 = por %p197, %p198
    %p200 = scmp.ne.s32.totalorder %s189, %s190
    %p201 = scmp.eq.s32.totalorder %s18, 0
    %p202 = por %p200, %p201
    %p203 = scmp.ne.s32.totalorder %s189, %s190
    %p204 = scmp.eq.s32.totalorder %s19, 1
    %p205 = por %p203, %p204
    %p207 = scmp.ne.s32.totalorder %s190, %s206
    %p208 = scmp.eq.s32.totalorder %s19, 0
    %p209 = por %p207, %p208
    %p210 = scmp.le.s32.totalorder 1, %s13
    %p211 = scmp.lt.s32.totalorder %s13, 3
    %p212 = pnand %p210, %p211
    %p213 = pneg %p212
    // Predicated region
    $region9: #{encoder_forward.2} parent=5 // pred_check
      _
    $region10: #{encoder_forward.2} parent=5 // pred_check_branch
      %215 = sbr.rel (%p212) target = $region12
    $region11: #{encoder_forward.2} parent=5 // pred_region
      %s216 = ssub.s32 %s13, 1
      // Predicated region
      $region13: #{encoder_forward.2} parent=11 // pred_check
        %p217 = pneg %p83
      $region14: #{encoder_forward.2} parent=11 // pred_check_branch
        %219 = sbr.rel (%p217) target = $region16
      $region15: #{encoder_forward.2} parent=11 // pred_region
        _
      $region16: #{encoder_forward.2} parent=11 // pred_fallthru
        _
      // Predicated region
      $region17: #{encoder_forward.2} parent=11 // pred_check
        %p220 = pneg %p104
      $region18: #{encoder_forward.2} parent=11 // pred_check_branch
        %222 = sbr.rel (%p220) target = $region20
      $region19: #{encoder_forward.2} parent=11 // pred_region
        _
      $region20: #{encoder_forward.2} parent=11 // pred_fallthru
        _
      // Predicated region
      $region21: #{encoder_forward.2} parent=11 // pred_check
        %p223 = pneg %p125
      $region22: #{encoder_forward.2} parent=11 // pred_check_branch
        %225 = sbr.rel (%p223) target = $region24
      $region23: #{encoder_forward.2} parent=11 // pred_region
        _
      $region24: #{encoder_forward.2} parent=11 // pred_fallthru
        _
      // Predicated region
      $region25: #{encoder_forward.2} parent=11 // pred_check
        %p226 = pneg %p146
      $region26: #{encoder_forward.2} parent=11 // pred_check_branch
        %228 = sbr.rel (%p226) target = $region28
      $region27: #{encoder_forward.2} parent=11 // pred_region
        _
      $region28: #{encoder_forward.2} parent=11 // pred_fallthru
        _
    $region12: #{encoder_forward.2} parent=5 // pred_fallthru
      _
    %p229 = scmp.lt.s32.totalorder %s13, 2
    // Predicated region
    $region29: #{encoder_forward.2} parent=5 // pred_check
      %p230 = pneg %p229
    $region30: #{encoder_forward.2} parent=5 // pred_check_branch
      %232 = sbr.rel (%p230) target = $region32
    $region31: #{encoder_forward.2} parent=5 // pred_region
      // Predicated region
      $region33: #{encoder_forward.2} parent=31 // pred_check
        %p233 = pneg %p56
      $region34: #{encoder_forward.2} parent=31 // pred_check_branch
        %235 = sbr.rel (%p233) target = $region36
      $region35: #{encoder_forward.2} parent=31 // pred_region
        %s236 = sadd.s32 %s21, %s22
        %s237 = smul.u32 2, %s236
        %p238 = scmp.lt.s32.totalorder %s20, 1
        %s239 = scalar_select %p238, %s20, 1
        %p240 = scmp.lt.s32.totalorder %s237, 1
        %s241 = scalar_select %p240, %s237, 1
        %s242 = smul.addr %s239, 2
        %s243 = sadd.s32 %s241, %s242
        %s244 = smul.addr %s243, 4
        %s245 = scalar_lea.vmem %s0, %s244
        %s246 = sadd.s32 %s21, %s22
        %s247 = smul.u32 2, %s246
      $region36: #{encoder_forward.2} parent=31 // pred_fallthru
        _
    $region32: #{encoder_forward.2} parent=5 // pred_fallthru
      _
    %p248 = scmp.le.s32.totalorder 1, %s13
    %p249 = scmp.lt.s32.totalorder %s13, 3
    %p250 = pnand %p248, %p249
    %p251 = pneg %p250
    // Predicated region
    $region37: #{encoder_forward.2} parent=5 // pred_check
      _
    $region38: #{encoder_forward.2} parent=5 // pred_check_branch
      %253 = sbr.rel (%p250) target = $region40
    $region39: #{encoder_forward.2} parent=5 // pred_region
      %s254 = ssub.s32 %s13, 1
      %s255 = sadd.s32 %s24, %s25
      %s256 = smul.u32 2, %s255
      %p257 = scmp.lt.s32.totalorder %s23, 1
      %s258 = scalar_select %p257, %s23, 1
      %p259 = scmp.lt.s32.totalorder %s256, 1
      %s260 = scalar_select %p259, %s256, 1
      %s261 = smul.addr %s258, 2
      %s262 = sadd.s32 %s260, %s261
      %s263 = smul.addr %s262, 4
      %s264 = scalar_lea.vmem %s0, %s263
      %p265 = pneg %p62
      %p266 = pneg %p59
      %p267 = pneg %p83
      %p268 = pneg %p80
      %p269 = pneg %p104
      %p270 = pneg %p101
      %p271 = pneg %p125
      %p272 = pneg %p122
      %p273 = pneg %p146
      %p274 = pneg %p143
      %p275 = pneg %p174
      %p276 = pneg %p171
      %p277 = scmp.lt.s32.totalorder %s23, 1
      %s278 = scalar_select %p277, %s23, 1
      %p279 = scmp.lt.s32.totalorder %s24, 0
      %s280 = scalar_select %p279, %s24, 0
      %s281 = sadd.s32 %s280, %s278
      %s282 = smul.addr %s281, 8
      %s283 = scalar_lea.vmem %s5, %s282
      %p284 = pneg %p202
      %p285 = pneg %p199
      %p286 = scmp.lt.s32.totalorder %s23, 1
      %s287 = scalar_select %p286, %s23, 1
      %p288 = scmp.lt.s32.totalorder %s24, 0
      %s289 = scalar_select %p288, %s24, 0
      %s290 = sadd.s32 %s289, %s287
      %s291 = smul.addr %s290, 8
      %s292 = scalar_lea.vmem %s6, %s291
      %s293 = sadd.s32 %s24, %s25
      %s294 = smul.u32 2, %s293
      %p295 = scmp.lt.s32.totalorder %s23, 1
      %s296 = scalar_select %p295, %s23, 1
      %p297 = scmp.lt.s32.totalorder %s294, 1
      %s298 = scalar_select %p297, %s294, 1
      %s299 = smul.addr %s296, 2
      %s300 = sadd.s32 %s298, %s299
      %s301 = smul.addr %s300, 4
      %s302 = scalar_lea.vmem %s0, %s301
      %s303 = sadd.s32 %s24, %s25
      %s304 = smul.u32 2, %s303
      %p305 = scmp.lt.s32.totalorder %s23, 1
      %s306 = scalar_select %p305, %s23, 1
      %p307 = scmp.lt.s32.totalorder %s24, 0
      %s308 = scalar_select %p307, %s24, 0
      %s309 = sadd.s32 %s308, %s306
      %s310 = smul.addr %s309, 8
      %s311 = scalar_lea.vmem %s5, %s310
      %p312 = scmp.lt.s32.totalorder %s23, 1
      %s313 = scalar_select %p312, %s23, 1
      %p314 = scmp.lt.s32.totalorder %s24, 0
      %s315 = scalar_select %p314, %s24, 0
      %s316 = sadd.s32 %s315, %s313
      %s317 = smul.addr %s316, 8
      %s318 = scalar_lea.vmem %s6, %s317
      %p319 = scmp.eq.s32.totalorder %s25, 0
      // Predicated region
      $region41: #{encoder_forward.2} parent=39 // pred_check
        %p320 = pneg %p319
      $region42: #{encoder_forward.2} parent=39 // pred_check_branch
        %322 = sbr.rel (%p320) target = $region44
      $region43: #{encoder_forward.2} parent=39 // pred_region
        %323 = vst [vmem:[#allocation2] sm:$0xff] 0.0
        %324 = vst [vmem:[#allocation3] sm:$0xff] 0.0
      $region44: #{encoder_forward.2} parent=39 // pred_fallthru
        _
      %v325 = vld [vmem:[%s302] sm:$0xff]
      %v326 = vld [vmem:[%s1] sm:$0xff]
      %v327 = vld [vmem:[%s2] sm:$0xff]
      %v328 = vld [vmem:[%s3] sm:$0xff]
      %v329 = vld [vmem:[%s4] sm:$0xff]
      %331 = vset.pattern.permute.xlu0 0
      %332 = vperm.xlu0 %331, %v326
      %v333 = vpop.permute.xlu0 %332
      %v336 = vperm.slane %v325, 0
      %v337 = vperm.slane %v325, 4
      %v340 = vperm.slane %v336, 0
      %v341 = vperm.slane %v337, 0
      %v342 = vmul.f32 %v333, %v340
      %v343 = vmul.f32 %v333, %v341
      %344 = vset.pattern.permute.xlu0 1
      %345 = vperm.xlu0 %344, %v326
      %v346 = vpop.permute.xlu0 %345
      %v348 = vperm.slane %v325, 1
      %v349 = vperm.slane %v325, 5
      %v352 = vperm.slane %v348, 1
      %v353 = vperm.slane %v349, 1
      %v354 = vmul.f32 %v346, %v352
      %v355 = vmul.f32 %v346, %v353
      %v356 = vadd.f32 %v342, %v354
      %v357 = vadd.f32 %v343, %v355
      %358 = vset.pattern.permute.xlu0 2
      %359 = vperm.xlu0 %358, %v326
      %v360 = vpop.permute.xlu0 %359
      %v362 = vperm.slane %v325, 2
      %v363 = vperm.slane %v325, 6
      %v366 = vperm.slane %v362, 2
      %v367 = vperm.slane %v363, 2
      %v368 = vmul.f32 %v360, %v366
      %v369 = vmul.f32 %v360, %v367
      %v370 = vadd.f32 %v356, %v368
      %v371 = vadd.f32 %v357, %v369
      %372 = vset.pattern.permute.xlu0 3
      %373 = vperm.xlu0 %372, %v326
      %v374 = vpop.permute.xlu0 %373
      %v376 = vperm.slane %v325, 3
      %v377 = vperm.slane %v325, 7
      %v380 = vperm.slane %v376, 3
      %v381 = vperm.slane %v377, 3
      %v382 = vmul.f32 %v374, %v380
      %v383 = vmul.f32 %v374, %v381
      %v384 = vadd.f32 %v370, %v382
      %v385 = vadd.f32 %v371, %v383
      %387 = vset.pattern.permute.xlu0 0
      %388 = vperm.xlu0 %387, %v327
      %v389 = vpop.permute.xlu0 %388
      %v391 = vadd.f32 %v384, %v389
      %v392 = vadd.f32 %v385, %v389
      %v393 = vmax.f32 %v391, 0.0
      %v394 = vmax.f32 %v392, 0.0
      %396 = vset.pattern.permute.xlu0 0
      %397 = vperm.xlu0 %396, %v328
      %v398 = vpop.permute.xlu0 %397
      %v400 = vperm.slane %v393, 0
      %v401 = vperm.slane %v394, 0
      %v402 = vmul.f32 %v398, %v400
      %v403 = vmul.f32 %v398, %v401
      %404 = vset.pattern.permute.xlu0 1
      %405 = vperm.xlu0 %404, %v328
      %v406 = vpop.permute.xlu0 %405
      %v408 = vperm.slane %v393, 1
      %v409 = vperm.slane %v394, 1
      %v410 = vmul.f32 %v406, %v408
      %v411 = vmul.f32 %v406, %v409
      %v412 = vadd.f32 %v402, %v410
      %v413 = vadd.f32 %v403, %v411
      %414 = vset.pattern.permute.xlu0 2
      %415 = vperm.xlu0 %414, %v328
      %v416 = vpop.permute.xlu0 %415
      %v418 = vperm.slane %v393, 2
      %v419 = vperm.slane %v394, 2
      %v420 = vmul.f32 %v416, %v418
      %v421 = vmul.f32 %v416, %v419
      %v422 = vadd.f32 %v412, %v420
      %v423 = vadd.f32 %v413, %v421
      %424 = vset.pattern.permute.xlu0 3
      %425 = vperm.xlu0 %424, %v328
      %v426 = vpop.permute.xlu0 %425
      %v428 = vperm.slane %v393, 3
      %v429 = vperm.slane %v394, 3
      %v430 = vmul.f32 %v426, %v428
      %v431 = vmul.f32 %v426, %v429
      %v432 = vadd.f32 %v422, %v430
      %v433 = vadd.f32 %v423, %v431
      %434 = vset.pattern.permute.xlu0 4
      %435 = vperm.xlu0 %434, %v328
      %v436 = vpop.permute.xlu0 %435
      %v438 = vperm.slane %v393, 4
      %v439 = vperm.slane %v394, 4
      %v440 = vmul.f32 %v436, %v438
      %v441 = vmul.f32 %v436, %v439
      %v442 = vadd.f32 %v432, %v440
      %v443 = vadd.f32 %v433, %v441
      %444 = vset.pattern.permute.xlu0 5
      %445 = vperm.xlu0 %444, %v328
      %v446 = vpop.permute.xlu0 %445
      %v448 = vperm.slane %v393, 5
      %v449 = vperm.slane %v394, 5
      %v450 = vmul.f32 %v446, %v448
      %v451 = vmul.f32 %v446, %v449
      %v452 = vadd.f32 %v442, %v450
      %v453 = vadd.f32 %v443, %v451
      %454 = vset.pattern.permute.xlu0 6
      %455 = vperm.xlu0 %454, %v328
      %v456 = vpop.permute.xlu0 %455
      %v458 = vperm.slane %v393, 6
      %v459 = vperm.slane %v394, 6
      %v460 = vmul.f32 %v456, %v458
      %v461 = vmul.f32 %v456, %v459
      %v462 = vadd.f32 %v452, %v460
      %v463 = vadd.f32 %v453, %v461
      %464 = vset.pattern.permute.xlu0 7
      %465 = vperm.xlu0 %464, %v328
      %v466 = vpop.permute.xlu0 %465
      %v468 = vperm.slane %v393, 7
      %v469 = vperm.slane %v394, 7
      %v470 = vmul.f32 %v466, %v468
      %v471 = vmul.f32 %v466, %v469
      %v472 = vadd.f32 %v462, %v470
      %v473 = vadd.f32 %v463, %v471
      %475 = vset.pattern.permute.xlu0 0
      %476 = vperm.xlu0 %475, %v329
      %v477 = vpop.permute.xlu0 %476
      %v479 = vadd.f32 %v472, %v477
      %v480 = vadd.f32 %v473, %v477
      %v481 = vmax.f32 %v479, 0.0
      %v482 = vmax.f32 %v480, 0.0
      %v483 = vmul.f32 %v481, %v481
      %v484 = vmul.f32 %v482, %v482
      %v485 = vld [vmem:[#allocation2] sm:$0xff]
      %v486 = vadd.f32 %v485, %v481
      %487 = vst [vmem:[#allocation2] sm:$0xff] %v486
      %v488 = vld [vmem:[#allocation3] sm:$0xff]
      %v489 = vadd.f32 %v488, %v483
      %490 = vst [vmem:[#allocation3] sm:$0xff] %v489
      %v491 = vld [vmem:[#allocation2] sm:$0xff]
      %v492 = vadd.f32 %v491, %v482
      %493 = vst [vmem:[#allocation2] sm:$0xff] %v492
      %v494 = vld [vmem:[#allocation3] sm:$0xff]
      %v495 = vadd.f32 %v494, %v484
      %496 = vst [vmem:[#allocation3] sm:$0xff] %v495
      // Predicated region
      $region45: #{encoder_forward.2} parent=39 // pred_check
        %p497 = pneg %p319
      $region46: #{encoder_forward.2} parent=39 // pred_check_branch
        %499 = sbr.rel (%p497) target = $region48
      $region47: #{encoder_forward.2} parent=39 // pred_region
        %v500 = vld [vmem:[#allocation2] sm:$0xff]
        %501 = vst [vmem:[%s311] sm:$0xff] %v500
        %v502 = vld [vmem:[#allocation3] sm:$0xff]
        %503 = vst [vmem:[%s318] sm:$0xff] %v502
      $region48: #{encoder_forward.2} parent=39 // pred_fallthru
        _
      %p504 = scmp.lt.s32.totalorder %s23, 1
      %s505 = scalar_select %p504, %s23, 1
      %p506 = scmp.lt.s32.totalorder %s24, 0
      %s507 = scalar_select %p506, %s24, 0
      %s508 = sadd.s32 %s507, %s505
      %s509 = smul.addr %s508, 8
      %s510 = scalar_lea.vmem %s5, %s509
      %p511 = scmp.lt.s32.totalorder %s23, 1
      %s512 = scalar_select %p511, %s23, 1
      %p513 = scmp.lt.s32.totalorder %s24, 0
      %s514 = scalar_select %p513, %s24, 0
      %s515 = sadd.s32 %s514, %s512
      %s516 = smul.addr %s515, 8
      %s517 = scalar_lea.vmem %s6, %s516
      // Predicated region
      $region49: #{encoder_forward.2} parent=39 // pred_check
        %p518 = pneg %p171
      $region50: #{encoder_forward.2} parent=39 // pred_check_branch
        %520 = sbr.rel (%p518) target = $region52
      $region51: #{encoder_forward.2} parent=39 // pred_region
        _
      $region52: #{encoder_forward.2} parent=39 // pred_fallthru
        _
      // Predicated region
      $region53: #{encoder_forward.2} parent=39 // pred_check
        %p521 = pneg %p199
      $region54: #{encoder_forward.2} parent=39 // pred_check_branch
        %523 = sbr.rel (%p521) target = $region56
      $region55: #{encoder_forward.2} parent=39 // pred_region
        _
      $region56: #{encoder_forward.2} parent=39 // pred_fallthru
        _
    $region40: #{encoder_forward.2} parent=5 // pred_fallthru
      _
    %p524 = scmp.le.s32.totalorder 2, %s13
    // Predicated region
    $region57: #{encoder_forward.2} parent=5 // pred_check
      %p525 = pneg %p524
    $region58: #{encoder_forward.2} parent=5 // pred_check_branch
      %527 = sbr.rel (%p525) target = $region60
    $region59: #{encoder_forward.2} parent=5 // pred_region
      %s528 = ssub.s32 %s13, 2
      // Predicated region
      $region61: #{encoder_forward.2} parent=59 // pred_check
        %p529 = pneg %p177
      $region62: #{encoder_forward.2} parent=59 // pred_check_branch
        %531 = sbr.rel (%p529) target = $region64
      $region63: #{encoder_forward.2} parent=59 // pred_region
        %p532 = scmp.lt.s32.totalorder %s26, 1
        %s533 = scalar_select %p532, %s26, 1
        %p534 = scmp.lt.s32.totalorder %s27, 0
        %s535 = scalar_select %p534, %s27, 0
        %s536 = sadd.s32 %s535, %s533
        %s537 = smul.addr %s536, 8
        %s538 = scalar_lea.vmem %s5, %s537
      $region64: #{encoder_forward.2} parent=59 // pred_fallthru
        _
      // Predicated region
      $region65: #{encoder_forward.2} parent=59 // pred_check
        %p539 = pneg %p205
      $region66: #{encoder_forward.2} parent=59 // pred_check_branch
        %541 = sbr.rel (%p539) target = $region68
      $region67: #{encoder_forward.2} parent=59 // pred_region
        %p542 = scmp.lt.s32.totalorder %s26, 1
        %s543 = scalar_select %p542, %s26, 1
        %p544 = scmp.lt.s32.totalorder %s27, 0
        %s545 = scalar_select %p544, %s27, 0
        %s546 = sadd.s32 %s545, %s543
        %s547 = smul.addr %s546, 8
        %s548 = scalar_lea.vmem %s6, %s547
      $region68: #{encoder_forward.2} parent=59 // pred_fallthru
        _
    $region60: #{encoder_forward.2} parent=5 // pred_fallthru
      _
  $region6: #{encoder_forward.2} parent=0 // loop_footer
    %s17 = sadd.s32 1, %s13
  $region7: #{encoder_forward.2} parent=0 // loop_footer_branch
    %12 = sbr.rel target = $region3
  $region8: #{encoder_forward.2} parent=0 // loop_exit
    _

// kernel: encoder_forward.3
$region0: #{encoder_forward.3}
  #allocation0 [shape = 'u32[]', space=smem, size = 0x4, offset = 0x4, fixed_abs, tag = 'smem constant byte address 0x4 - core index']
  #allocation1 [shape = 'u32[72,128]{1,0:T(1,128)}', space=vmem, size = 0x9000, scoped, tag = 'internal scratch']
  %s0 = inlined_call_operand.vmem [shape: f32[2,4,256], index: 0, kind: input, shape index: {}]
  %s1 = inlined_call_operand.vmem [shape: f32[8,4], index: 1, kind: input, shape index: {}]
  %s2 = inlined_call_operand.vmem [shape: f32[8,1], index: 2, kind: input, shape index: {}]
  %s3 = inlined_call_operand.vmem [shape: f32[8,8], index: 3, kind: input, shape index: {}]
  %s4 = inlined_call_operand.vmem [shape: f32[8,1], index: 4, kind: input, shape index: {}]
  %s5 = inlined_call_operand.vmem [shape: f32[8,1], index: 5, kind: input, shape index: {}]
  %s6 = inlined_call_operand.vmem [shape: f32[8,1], index: 6, kind: input, shape index: {}]
  %s7 = inlined_call_operand.vmem [shape: f32[2,8,256], index: 7, kind: output, shape index: {}]
  %s8 = sld [smem:[#allocation0]]
  $region61: #{encoder_forward.3} parent=0
    _
  %s10 = ssub.s32 1, %s8
  %s11 = scalar_select 0, %s10, %s8
  loop: start=0, step=1, limit=4
  $region2: #{encoder_forward.3} parent=0 // loop_pre_header
    _
  $region3: #{encoder_forward.3} parent=0 // loop_header
    %s13 = sphi 0, %s17
    %p14 = scmp.ge.s32.totalorder %s13, 4
    %s20 = sphi 0, %s32
    %s21 = sphi 0, %s28
    %s22 = sphi 0, %s20
    %s23 = sphi 0, %s21
    %s24 = sphi 0, %s22
    %s25 = sphi 0, %s23
    %s37 = sphi 0, %s39
    %s40 = sphi 0, %s37
    %s41 = sphi 0, %s40
    %s57 = sphi 0, %s41
    %s61 = sphi 0, %s61
    %s63 = sphi 0, %s61
    %s64 = sphi 0, %s63
    %s78 = sphi 0, %s64
    %s82 = sphi 0, %s82
    %s84 = sphi 0, %s82
    %s85 = sphi 0, %s84
    %s99 = sphi 0, %s85
    %s103 = sphi 0, %s103
    %s105 = sphi 0, %s103
    %s106 = sphi 0, %s105
    %s120 = sphi 0, %s106
    %s124 = sphi 0, %s124
    %s126 = sphi 0, %s124
    %s127 = sphi 0, %s126
    %s141 = sphi 0, %s127
    %s145 = sphi 0, %s145
    %s147 = sphi 0, %s145
    %s148 = sphi 0, %s147
    %s162 = sphi 0, %s148
    %s166 = sphi 0, %s166
    %s168 = sphi 0, %s166
    %s169 = sphi 0, %s168
    %s183 = sphi 0, %s169
    %s191 = sphi 0, %s193
    %s194 = sphi 0, %s191
    %s195 = sphi 0, %s194
    %s211 = sphi 0, %s195
  $region4: #{encoder_forward.3} parent=0 // loop_header_branch
    %16 = sbr.rel (%p14) target = $region8
  $region5: #{encoder_forward.3} parent=0 // loop_body
    %s18 = ssub.s32 %s13, 1
    %s19 = ssub.s32 %s13, 2
    %s26 = sadd.s32 1, %s21
    %p27 = scmp.ge.s32.totalorder %s26, 1
    %s28 = scalar_select %p27, 0, %s26
    %s29 = sadd.s32 1, %s20
    %s30 = scalar_select %p27, %s29, %s20
    %p31 = scmp.ge.s32.totalorder %s30, 2
    %s32 = scalar_select %p31, 0, %s30
    %s33 = ssub.s32 %s20, %s32
    %s34 = ssub.s32 %s21, %s28
    %s35 = sor.u32 %s33, %s34
    %p36 = scmp.eq.s32.totalorder %s35, 0
    %s38 = sadd.s32 %s37, 1
    %s39 = scalar_select %p36, %s37, %s38
    %p42 = pneg %p36
    %p43 = scmp.eq.s32.totalorder %s13, 1
    %p44 = por %p42, %p43
    %p45 = scmp.ne.s32.totalorder %s37, %s40
    %p46 = scmp.eq.s32.totalorder %s13, 0
    %p47 = por %p45, %p46
    %p48 = scmp.ne.s32.totalorder %s37, %s40
    %p49 = scmp.eq.s32.totalorder %s18, 1
    %p50 = por %p48, %p49
    %p51 = scmp.ne.s32.totalorder %s40, %s41
    %p52 = scmp.eq.s32.totalorder %s18, 0
    %p53 = por %p51, %p52
    %p54 = scmp.ne.s32.totalorder %s40, %s41
    %p55 = scmp.eq.s32.totalorder %s19, 1
    %p56 = por %p54, %p55
    %p58 = scmp.ne.s32.totalorder %s41, %s57
    %p59 = scmp.eq.s32.totalorder %s19, 0
    %p60 = por %p58, %p59
    %s62 = sadd.s32 %s61, 1
    %p65 = scmp.eq.s32.totalorder %s13, 1
    %p66 = scmp.ne.s32.totalorder %s61, %s63
    %p67 = scmp.eq.s32.totalorder %s13, 0
    %p68 = por %p66, %p67
    %p69 = scmp.ne.s32.totalorder %s61, %s63
    %p70 = scmp.eq.s32.totalorder %s18, 1
    %p71 = por %p69, %p70
    %p72 = scmp.ne.s32.totalorder %s63, %s64
    %p73 = scmp.eq.s32.totalorder %s18, 0
    %p74 = por %p72, %p73
    %p75 = scmp.ne.s32.totalorder %s63, %s64
    %p76 = scmp.eq.s32.totalorder %s19, 1
    %p77 = por %p75, %p76
    %p79 = scmp.ne.s32.totalorder %s64, %s78
    %p80 = scmp.eq.s32.totalorder %s19, 0
    %p81 = por %p79, %p80
    %s83 = sadd.s32 %s82, 1
    %p86 = scmp.eq.s32.totalorder %s13, 1
    %p87 = scmp.ne.s32.totalorder %s82, %s84
    %p88 = scmp.eq.s32.totalorder %s13, 0
    %p89 = por %p87, %p88
    %p90 = scmp.ne.s32.totalorder %s82, %s84
    %p91 = scmp.eq.s32.totalorder %s18, 1
    %p92 = por %p90, %p91
    %p93 = scmp.ne.s32.totalorder %s84, %s85
    %p94 = scmp.eq.s32.totalorder %s18, 0
    %p95 = por %p93, %p94
    %p96 = scmp.ne.s32.totalorder %s84, %s85
    %p97 = scmp.eq.s32.totalorder %s19, 1
    %p98 = por %p96, %p97
    %p100 = scmp.ne.s32.totalorder %s85, %s99
    %p101 = scmp.eq.s32.totalorder %s19, 0
    %p102 = por %p100, %p101
    %s104 = sadd.s32 %s103, 1
    %p107 = scmp.eq.s32.totalorder %s13, 1
    %p108 = scmp.ne.s32.totalorder %s103, %s105
    %p109 = scmp.eq.s32.totalorder %s13, 0
    %p110 = por %p108, %p109
    %p111 = scmp.ne.s32.totalorder %s103, %s105
    %p112 = scmp.eq.s32.totalorder %s18, 1
    %p113 = por %p111, %p112
    %p114 = scmp.ne.s32.totalorder %s105, %s106
    %p115 = scmp.eq.s32.totalorder %s18, 0
    %p116 = por %p114, %p115
    %p117 = scmp.ne.s32.totalorder %s105, %s106
    %p118 = scmp.eq.s32.totalorder %s19, 1
    %p119 = por %p117, %p118
    %p121 = scmp.ne.s32.totalorder %s106, %s120
    %p122 = scmp.eq.s32.totalorder %s19, 0
    %p123 = por %p121, %p122
    %s125 = sadd.s32 %s124, 1
    %p128 = scmp.eq.s32.totalorder %s13, 1
    %p129 = scmp.ne.s32.totalorder %s124, %s126
    %p130 = scmp.eq.s32.totalorder %s13, 0
    %p131 = por %p129, %p130
    %p132 = scmp.ne.s32.totalorder %s124, %s126
    %p133 = scmp.eq.s32.totalorder %s18, 1
    %p134 = por %p132, %p133
    %p135 = scmp.ne.s32.totalorder %s126, %s127
    %p136 = scmp.eq.s32.totalorder %s18, 0
    %p137 = por %p135, %p136
    %p138 = scmp.ne.s32.totalorder %s126, %s127
    %p139 = scmp.eq.s32.totalorder %s19, 1
    %p140 = por %p138, %p139
    %p142 = scmp.ne.s32.totalorder %s127, %s141
    %p143 = scmp.eq.s32.totalorder %s19, 0
    %p144 = por %p142, %p143
    %s146 = sadd.s32 %s145, 1
    %p149 = scmp.eq.s32.totalorder %s13, 1
    %p150 = scmp.ne.s32.totalorder %s145, %s147
    %p151 = scmp.eq.s32.totalorder %s13, 0
    %p152 = por %p150, %p151
    %p153 = scmp.ne.s32.totalorder %s145, %s147
    %p154 = scmp.eq.s32.totalorder %s18, 1
    %p155 = por %p153, %p154
    %p156 = scmp.ne.s32.totalorder %s147, %s148
    %p157 = scmp.eq.s32.totalorder %s18, 0
    %p158 = por %p156, %p157
    %p159 = scmp.ne.s32.totalorder %s147, %s148
    %p160 = scmp.eq.s32.totalorder %s19, 1
    %p161 = por %p159, %p160
    %p163 = scmp.ne.s32.totalorder %s148, %s162
    %p164 = scmp.eq.s32.totalorder %s19, 0
    %p165 = por %p163, %p164
    %s167 = sadd.s32 %s166, 1
    %p170 = scmp.eq.s32.totalorder %s13, 1
    %p171 = scmp.ne.s32.totalorder %s166, %s168
    %p172 = scmp.eq.s32.totalorder %s13, 0
    %p173 = por %p171, %p172
    %p174 = scmp.ne.s32.totalorder %s166, %s168
    %p175 = scmp.eq.s32.totalorder %s18, 1
    %p176 = por %p174, %p175
    %p177 = scmp.ne.s32.totalorder %s168, %s169
    %p178 = scmp.eq.s32.totalorder %s18, 0
    %p179 = por %p177, %p178
    %p180 = scmp.ne.s32.totalorder %s168, %s169
    %p181 = scmp.eq.s32.totalorder %s19, 1
    %p182 = por %p180, %p181
    %p184 = scmp.ne.s32.totalorder %s169, %s183
    %p185 = scmp.eq.s32.totalorder %s19, 0
    %p186 = por %p184, %p185
    %s187 = ssub.s32 %s20, %s32
    %s188 = ssub.s32 %s21, %s28
    %s189 = sor.u32 %s187, %s188
    %p190 = scmp.eq.s32.totalorder %s189, 0
    %s192 = sadd.s32 %s191, 1
    %s193 = scalar_select %p190, %s191, %s192
    %p196 = pneg %p190
    %p197 = scmp.eq.s32.totalorder %s13, 1
    %p198 = por %p196, %p197
    %p199 = scmp.ne.s32.totalorder %s191, %s194
    %p200 = scmp.eq.s32.totalorder %s13, 0
    %p201 = por %p199, %p200
    %p202 = scmp.ne.s32.totalorder %s191, %s194
    %p203 = scmp.eq.s32.totalorder %s18, 1
    %p204 = por %p202, %p203
    %p205 = scmp.ne.s32.totalorder %s194, %s195
    %p206 = scmp.eq.s32.totalorder %s18, 0
    %p207 = por %p205, %p206
    %p208 = scmp.ne.s32.totalorder %s194, %s195
    %p209 = scmp.eq.s32.totalorder %s19, 1
    %p210 = por %p208, %p209
    %p212 = scmp.ne.s32.totalorder %s195, %s211
    %p213 = scmp.eq.s32.totalorder %s19, 0
    %p214 = por %p212, %p213
    %p215 = scmp.le.s32.totalorder 1, %s13
    %p216 = scmp.lt.s32.totalorder %s13, 3
    %p217 = pnand %p215, %p216
    %p218 = pneg %p217
    // Predicated region
    $region9: #{encoder_forward.3} parent=5 // pred_check
      _
    $region10: #{encoder_forward.3} parent=5 // pred_check_branch
      %220 = sbr.rel (%p217) target = $region12
    $region11: #{encoder_forward.3} parent=5 // pred_region
      %s221 = ssub.s32 %s13, 1
      // Predicated region
      $region13: #{encoder_forward.3} parent=11 // pred_check
        %p222 = pneg %p74
      $region14: #{encoder_forward.3} parent=11 // pred_check_branch
        %224 = sbr.rel (%p222) target = $region16
      $region15: #{encoder_forward.3} parent=11 // pred_region
        _
      $region16: #{encoder_forward.3} parent=11 // pred_fallthru
        _
      // Predicated region
      $region17: #{encoder_forward.3} parent=11 // pred_check
        %p225 = pneg %p95
      $region18: #{encoder_forward.3} parent=11 // pred_check_branch
        %227 = sbr.rel (%p225) target = $region20
      $region19: #{encoder_forward.3} parent=11 // pred_region
        _
      $region20: #{encoder_forward.3} parent=11 // pred_fallthru
        _
      // Predicated region
      $region21: #{encoder_forward.3} parent=11 // pred_check
        %p228 = pneg %p116
      $region22: #{encoder_forward.3} parent=11 // pred_check_branch
        %230 = sbr.rel (%p228) target = $region24
      $region23: #{encoder_forward.3} parent=11 // pred_region
        _
      $region24: #{encoder_forward.3} parent=11 // pred_fallthru
        _
      // Predicated region
      $region25: #{encoder_forward.3} parent=11 // pred_check
        %p231 = pneg %p137
      $region26: #{encoder_forward.3} parent=11 // pred_check_branch
        %233 = sbr.rel (%p231) target = $region28
      $region27: #{encoder_forward.3} parent=11 // pred_region
        _
      $region28: #{encoder_forward.3} parent=11 // pred_fallthru
        _
      // Predicated region
      $region29: #{encoder_forward.3} parent=11 // pred_check
        %p234 = pneg %p158
      $region30: #{encoder_forward.3} parent=11 // pred_check_branch
        %236 = sbr.rel (%p234) target = $region32
      $region31: #{encoder_forward.3} parent=11 // pred_region
        _
      $region32: #{encoder_forward.3} parent=11 // pred_fallthru
        _
      // Predicated region
      $region33: #{encoder_forward.3} parent=11 // pred_check
        %p237 = pneg %p179
      $region34: #{encoder_forward.3} parent=11 // pred_check_branch
        %239 = sbr.rel (%p237) target = $region36
      $region35: #{encoder_forward.3} parent=11 // pred_region
        _
      $region36: #{encoder_forward.3} parent=11 // pred_fallthru
        _
    $region12: #{encoder_forward.3} parent=5 // pred_fallthru
      _
    %p240 = scmp.lt.s32.totalorder %s13, 2
    // Predicated region
    $region37: #{encoder_forward.3} parent=5 // pred_check
      %p241 = pneg %p240
    $region38: #{encoder_forward.3} parent=5 // pred_check_branch
      %243 = sbr.rel (%p241) target = $region40
    $region39: #{encoder_forward.3} parent=5 // pred_region
      // Predicated region
      $region41: #{encoder_forward.3} parent=39 // pred_check
        %p244 = pneg %p47
      $region42: #{encoder_forward.3} parent=39 // pred_check_branch
        %246 = sbr.rel (%p244) target = $region44
      $region43: #{encoder_forward.3} parent=39 // pred_region
        %s247 = smul.u32 2, %s21
        %p248 = scmp.lt.s32.totalorder %s20, 1
        %s249 = scalar_select %p248, %s20, 1
        %p250 = scmp.lt.s32.totalorder %s247, 1
        %s251 = scalar_select %p250, %s247, 1
        %s252 = smul.addr %s249, 2
        %s253 = sadd.s32 %s251, %s252
        %s254 = smul.addr %s253, 4
        %s255 = scalar_lea.vmem %s0, %s254
        %s256 = smul.u32 2, %s21
      $region44: #{encoder_forward.3} parent=39 // pred_fallthru
        _
    $region40: #{encoder_forward.3} parent=5 // pred_fallthru
      _
    %p257 = scmp.le.s32.totalorder 1, %s13
    %p258 = scmp.lt.s32.totalorder %s13, 3
    %p259 = pnand %p257, %p258
    %p260 = pneg %p259
    // Predicated region
    $region45: #{encoder_forward.3} parent=5 // pred_check
      _
    $region46: #{encoder_forward.3} parent=5 // pred_check_branch
      %262 = sbr.rel (%p259) target = $region48
    $region47: #{encoder_forward.3} parent=5 // pred_region
      %s263 = ssub.s32 %s13, 1
      %s264 = smul.u32 2, %s23
      %p265 = scmp.lt.s32.totalorder %s22, 1
      %s266 = scalar_select %p265, %s22, 1
      %p267 = scmp.lt.s32.totalorder %s264, 1
      %s268 = scalar_select %p267, %s264, 1
      %s269 = smul.addr %s266, 2
      %s270 = sadd.s32 %s268, %s269
      %s271 = smul.addr %s270, 4
      %s272 = scalar_lea.vmem %s0, %s271
      %p273 = pneg %p53
      %p274 = pneg %p50
      %p275 = pneg %p74
      %p276 = pneg %p71
      %p277 = pneg %p95
      %p278 = pneg %p92
      %p279 = pneg %p116
      %p280 = pneg %p113
      %p281 = pneg %p137
      %p282 = pneg %p134
      %p283 = pneg %p158
      %p284 = pneg %p155
      %p285 = pneg %p179
      %p286 = pneg %p176
      %p287 = pneg %p207
      %p288 = pneg %p204
      %s289 = smul.u32 2, %s23
      %p290 = scmp.lt.s32.totalorder %s22, 1
      %s291 = scalar_select %p290, %s22, 1
      %p292 = scmp.lt.s32.totalorder %s289, 1
      %s293 = scalar_select %p292, %s289, 1
      %s294 = smul.addr %s291, 2
      %s295 = sadd.s32 %s293, %s294
      %s296 = smul.addr %s295, 8
      %s297 = scalar_lea.vmem %s7, %s296
      %s298 = smul.u32 2, %s23
      %p299 = scmp.lt.s32.totalorder %s22, 1
      %s300 = scalar_select %p299, %s22, 1
      %p301 = scmp.lt.s32.totalorder %s298, 1
      %s302 = scalar_select %p301, %s298, 1
      %s303 = smul.addr %s300, 2
      %s304 = sadd.s32 %s302, %s303
      %s305 = smul.addr %s304, 4
      %s306 = scalar_lea.vmem %s0, %s305
      %s307 = smul.u32 2, %s23
      %s308 = smul.u32 2, %s23
      %p309 = scmp.lt.s32.totalorder %s22, 1
      %s310 = scalar_select %p309, %s22, 1
      %p311 = scmp.lt.s32.totalorder %s308, 1
      %s312 = scalar_select %p311, %s308, 1
      %s313 = smul.addr %s310, 2
      %s314 = sadd.s32 %s312, %s313
      %s315 = smul.addr %s314, 8
      %s316 = scalar_lea.vmem %s7, %s315
      %s317 = smul.u32 2, %s23
      %v318 = vld [vmem:[%s306] sm:$0xff]
      %v319 = vld [vmem:[%s1] sm:$0xff]
      %v320 = vld [vmem:[%s2] sm:$0xff]
      %v321 = vld [vmem:[%s3] sm:$0xff]
      %v322 = vld [vmem:[%s4] sm:$0xff]
      %324 = vset.pattern.permute.xlu0 0
      %325 = vperm.xlu0 %324, %v319
      %v326 = vpop.permute.xlu0 %325
      %v329 = vperm.slane %v318, 0
      %v330 = vperm.slane %v318, 4
      %v333 = vperm.slane %v329, 0
      %v334 = vperm.slane %v330, 0
      %v335 = vmul.f32 %v326, %v333
      %v336 = vmul.f32 %v326, %v334
      %337 = vset.pattern.permute.xlu0 1
      %338 = vperm.xlu0 %337, %v319
      %v339 = vpop.permute.xlu0 %338
      %v341 = vperm.slane %v318, 1
      %v342 = vperm.slane %v318, 5
      %v345 = vperm.slane %v341, 1
      %v346 = vperm.slane %v342, 1
      %v347 = vmul.f32 %v339, %v345
      %v348 = vmul.f32 %v339, %v346
      %v349 = vadd.f32 %v335, %v347
      %v350 = vadd.f32 %v336, %v348
      %351 = vset.pattern.permute.xlu0 2
      %352 = vperm.xlu0 %351, %v319
      %v353 = vpop.permute.xlu0 %352
      %v355 = vperm.slane %v318, 2
      %v356 = vperm.slane %v318, 6
      %v359 = vperm.slane %v355, 2
      %v360 = vperm.slane %v356, 2
      %v361 = vmul.f32 %v353, %v359
      %v362 = vmul.f32 %v353, %v360
      %v363 = vadd.f32 %v349, %v361
      %v364 = vadd.f32 %v350, %v362
      %365 = vset.pattern.permute.xlu0 3
      %366 = vperm.xlu0 %365, %v319
      %v367 = vpop.permute.xlu0 %366
      %v369 = vperm.slane %v318, 3
      %v370 = vperm.slane %v318, 7
      %v373 = vperm.slane %v369, 3
      %v374 = vperm.slane %v370, 3
      %v375 = vmul.f32 %v367, %v373
      %v376 = vmul.f32 %v367, %v374
      %v377 = vadd.f32 %v363, %v375
      %v378 = vadd.f32 %v364, %v376
      %380 = vset.pattern.permute.xlu0 0
      %381 = vperm.xlu0 %380, %v320
      %v382 = vpop.permute.xlu0 %381
      %v384 = vadd.f32 %v377, %v382
      %v385 = vadd.f32 %v378, %v382
      %v386 = vmax.f32 %v384, 0.0
      %v387 = vmax.f32 %v385, 0.0
      %389 = vset.pattern.permute.xlu0 0
      %390 = vperm.xlu0 %389, %v321
      %v391 = vpop.permute.xlu0 %390
      %v393 = vperm.slane %v386, 0
      %v394 = vperm.slane %v387, 0
      %v395 = vmul.f32 %v391, %v393
      %v396 = vmul.f32 %v391, %v394
      %397 = vset.pattern.permute.xlu0 1
      %398 = vperm.xlu0 %397, %v321
      %v399 = vpop.permute.xlu0 %398
      %v401 = vperm.slane %v386, 1
      %v402 = vperm.slane %v387, 1
      %v403 = vmul.f32 %v399, %v401
      %v404 = vmul.f32 %v399, %v402
      %v405 = vadd.f32 %v395, %v403
      %v406 = vadd.f32 %v396, %v404
      %407 = vset.pattern.permute.xlu0 2
      %408 = vperm.xlu0 %407, %v321
      %v409 = vpop.permute.xlu0 %408
      %v411 = vperm.slane %v386, 2
      %v412 = vperm.slane %v387, 2
      %v413 = vmul.f32 %v409, %v411
      %v414 = vmul.f32 %v409, %v412
      %v415 = vadd.f32 %v405, %v413
      %v416 = vadd.f32 %v406, %v414
      %417 = vset.pattern.permute.xlu0 3
      %418 = vperm.xlu0 %417, %v321
      %v419 = vpop.permute.xlu0 %418
      %v421 = vperm.slane %v386, 3
      %v422 = vperm.slane %v387, 3
      %v423 = vmul.f32 %v419, %v421
      %v424 = vmul.f32 %v419, %v422
      %v425 = vadd.f32 %v415, %v423
      %v426 = vadd.f32 %v416, %v424
      %427 = vset.pattern.permute.xlu0 4
      %428 = vperm.xlu0 %427, %v321
      %v429 = vpop.permute.xlu0 %428
      %v431 = vperm.slane %v386, 4
      %v432 = vperm.slane %v387, 4
      %v433 = vmul.f32 %v429, %v431
      %v434 = vmul.f32 %v429, %v432
      %v435 = vadd.f32 %v425, %v433
      %v436 = vadd.f32 %v426, %v434
      %437 = vset.pattern.permute.xlu0 5
      %438 = vperm.xlu0 %437, %v321
      %v439 = vpop.permute.xlu0 %438
      %v441 = vperm.slane %v386, 5
      %v442 = vperm.slane %v387, 5
      %v443 = vmul.f32 %v439, %v441
      %v444 = vmul.f32 %v439, %v442
      %v445 = vadd.f32 %v435, %v443
      %v446 = vadd.f32 %v436, %v444
      %447 = vset.pattern.permute.xlu0 6
      %448 = vperm.xlu0 %447, %v321
      %v449 = vpop.permute.xlu0 %448
      %v451 = vperm.slane %v386, 6
      %v452 = vperm.slane %v387, 6
      %v453 = vmul.f32 %v449, %v451
      %v454 = vmul.f32 %v449, %v452
      %v455 = vadd.f32 %v445, %v453
      %v456 = vadd.f32 %v446, %v454
      %457 = vset.pattern.permute.xlu0 7
      %458 = vperm.xlu0 %457, %v321
      %v459 = vpop.permute.xlu0 %458
      %v461 = vperm.slane %v386, 7
      %v462 = vperm.slane %v387, 7
      %v463 = vmul.f32 %v459, %v461
      %v464 = vmul.f32 %v459, %v462
      %v465 = vadd.f32 %v455, %v463
      %v466 = vadd.f32 %v456, %v464
      %468 = vset.pattern.permute.xlu0 0
      %469 = vperm.xlu0 %468, %v322
      %v470 = vpop.permute.xlu0 %469
      %v472 = vadd.f32 %v465, %v470
      %v473 = vadd.f32 %v466, %v470
      %v474 = vmax.f32 %v472, 0.0
      %v475 = vmax.f32 %v473, 0.0
      %v476 = vld [vmem:[%s5] sm:$0xff]
      %478 = vset.pattern.permute.xlu0 0
      %479 = vperm.xlu0 %478, %v476
      %v480 = vpop.permute.xlu0 %479
      %v482 = vmul.f32 %v474, %v480
      %v483 = vmul.f32 %v475, %v480
      %v484 = vld [vmem:[%s6] sm:$0xff]
      %486 = vset.pattern.permute.xlu0 0
      %487 = vperm.xlu0 %486, %v484
      %v488 = vpop.permute.xlu0 %487
      %v490 = vadd.f32 %v482, %v488
      %v491 = vadd.f32 %v483, %v488
      %492 = vst [vmem:[%s316] sm:$0xff] %v490
      %493 = vst [vmem:[%s316 + $0x8] sm:$0xff] %v491
      %s494 = smul.u32 2, %s23
      %p495 = scmp.lt.s32.totalorder %s22, 1
      %s496 = scalar_select %p495, %s22, 1
      %p497 = scmp.lt.s32.totalorder %s494, 1
      %s498 = scalar_select %p497, %s494, 1
      %s499 = smul.addr %s496, 2
      %s500 = sadd.s32 %s498, %s499
      %s501 = smul.addr %s500, 8
      %s502 = scalar_lea.vmem %s7, %s501
      // Predicated region
      $region49: #{encoder_forward.3} parent=47 // pred_check
        %p503 = pneg %p204
      $region50: #{encoder_forward.3} parent=47 // pred_check_branch
        %505 = sbr.rel (%p503) target = $region52
      $region51: #{encoder_forward.3} parent=47 // pred_region
        %s506 = smul.u32 2, %s23
      $region52: #{encoder_forward.3} parent=47 // pred_fallthru
        _
    $region48: #{encoder_forward.3} parent=5 // pred_fallthru
      _
    %p507 = scmp.le.s32.totalorder 2, %s13
    // Predicated region
    $region53: #{encoder_forward.3} parent=5 // pred_check
      %p508 = pneg %p507
    $region54: #{encoder_forward.3} parent=5 // pred_check_branch
      %510 = sbr.rel (%p508) target = $region56
    $region55: #{encoder_forward.3} parent=5 // pred_region
      %s511 = ssub.s32 %s13, 2
      // Predicated region
      $region57: #{encoder_forward.3} parent=55 // pred_check
        %p512 = pneg %p210
      $region58: #{encoder_forward.3} parent=55 // pred_check_branch
        %514 = sbr.rel (%p512) target = $region60
      $region59: #{encoder_forward.3} parent=55 // pred_region
        %s515 = smul.u32 2, %s25
        %p516 = scmp.lt.s32.totalorder %s24, 1
        %s517 = scalar_select %p516, %s24, 1
        %p518 = scmp.lt.s32.totalorder %s515, 1
        %s519 = scalar_select %p518, %s515, 1
        %s520 = smul.addr %s517, 2
        %s521 = sadd.s32 %s519, %s520
        %s522 = smul.addr %s521, 8
        %s523 = scalar_lea.vmem %s7, %s522
      $region60: #{encoder_forward.3} parent=55 // pred_fallthru
        _
    $region56: #{encoder_forward.3} parent=5 // pred_fallthru
      _
  $region6: #{encoder_forward.3} parent=0 // loop_footer
    %s17 = sadd.s32 1, %s13
  $region7: #{encoder_forward.3} parent=0 // loop_footer_branch
    %12 = sbr.rel target = $region3
  $region8: #{encoder_forward.3} parent=0 // loop_exit
    _

</llo_original>
